<compile_context>
chip_gen: v7x
topology: tpu7x:2x2x1
jax: 0.10.0
libtpu: 0.0.40
codegen_flags: <defaults>
</compile_context>

<pallas_src>
import functools

import jax
import jax.numpy as jnp
import numpy as np
from jax import lax
from jax.experimental import pallas as pl
from jax.experimental.pallas import tpu as pltpu


def _mha_kernel(q_ref, k_ref, v_ref, wq_ref, wk_ref, wv_ref, wo_ref,
                out_ref, *rest, n_head, d_head, seq_len, batch_block,
                need_weights):
    """One grid step: `batch_block` batch elements, all heads, fully fused."""
    if need_weights:
        attn_ref, concat_ref = rest
    else:
        (concat_ref,) = rest

    # Head-fused projections with batch folded into the matmul M-dim:
    # one (batch_block*S, H) @ (H, H) MXU call per projection, f32 accumulation.
    # 1/sqrt(D) is pre-folded into wq in the wrapper.
    q_all = jnp.dot(q_ref[...], wq_ref[...], preferred_element_type=jnp.float32)
    k_all = jnp.dot(k_ref[...], wk_ref[...], preferred_element_type=jnp.float32)
    v_all = jnp.dot(v_ref[...], wv_ref[...], preferred_element_type=jnp.float32)

    # One bf16 cast per tensor (3 pack passes total) instead of per-head casts.
    q_b16 = q_all.astype(jnp.bfloat16)
    k_b16 = k_all.astype(jnp.bfloat16)
    v_b16 = v_all.astype(jnp.bfloat16)

    s = seq_len
    # batch_block and n_head are small & static -> fully unrolled; LLO schedules
    # the tiny matmuls and per-head stores overlap the next head's compute.
    for b in range(batch_block):
        rs = slice(b * s, (b + 1) * s)
        for h in range(n_head):
            cs = slice(h * d_head, (h + 1) * d_head)
            qh = q_b16[rs, cs]                                 # (S, D) bf16
            kh = k_b16[rs, cs]                                 # (S, D) bf16
            vh = v_b16[rs, cs]                                 # (S, D) bf16

            # q @ k^T with the transpose folded into the MXU contraction
            # (no XLU transpose, no VMEM copy of K).
            scores = lax.dot_general(
                qh, kh,
                dimension_numbers=(((1,), (1,)), ((), ())),
                preferred_element_type=jnp.float32)            # (S, S) f32

            # Numerically stable softmax. Exact reciprocal: these probabilities
            # are returned to the caller, so no approx error on attn rows.
            m = jnp.max(scores, axis=-1, keepdims=True)
            e = jnp.exp(scores - m)
            denom = jnp.sum(e, axis=-1, keepdims=True)
            attn = e * pl.reciprocal(denom, approx=False)      # (S, S) f32

            if need_weights:
                # Direct per-(batch, head) store -- no list + jnp.stack.
                attn_ref[b, h] = attn

            # Head output written straight into the concat scratch slab.
            concat_ref[rs, cs] = jnp.dot(attn.astype(jnp.bfloat16), vh,
                                         preferred_element_type=jnp.float32)

    # concat-heads then o_w as ONE (batch_block*S, H) @ (H, H) matmul.
    out_ref[...] = jnp.dot(concat_ref[...].astype(jnp.bfloat16), wo_ref[...],
                           preferred_element_type=jnp.float32)


def multi_head_attention(query, key, value, wq, wk, wv, wo_stacked, *,
                         batch_block=None, need_weights=True):
    """
    query/key/value: (B, S, H) f32
    wq/wk/wv:        (n_head, H, D) f32   (x @ wq[h] == PyTorch q_w(x) for head h)
    wo_stacked:      (n_head, D, H) f32   (concat-heads @ reshape == o_w(concat))
    batch_block:     batch elements per grid step. Default B (grid collapsed to
                     one step; best on single-TC v5e/v6e at small shapes). On
                     v7x use B // 2 so both TensorCores are fed.
    need_weights:    if False, skip computing/storing the attention-score slab.
    returns: (output (B, S, H) f32,
              attention_scores (B, n_head, S, S) f32 or None)
    """
    B, S, H = query.shape
    n_head, _, D = wq.shape
    assert H == n_head * D
    if batch_block is None:
        batch_block = B
    assert B % batch_block == 0
    inv_scale = 1.0 / float(np.sqrt(D))

    # Head-fused (H, H) bf16 weights. 1/sqrt(D) folded into wq here (once per
    # call, off the hot path) -> removes a full (M, H) VPU pass from the kernel.
    wq_all = (jnp.transpose(wq, (1, 0, 2)).reshape(H, n_head * D)
              * inv_scale).astype(jnp.bfloat16)
    wk_all = jnp.transpose(wk, (1, 0, 2)).reshape(H, n_head * D).astype(jnp.bfloat16)
    wv_all = jnp.transpose(wv, (1, 0, 2)).reshape(H, n_head * D).astype(jnp.bfloat16)
    wo_full = wo_stacked.reshape(n_head * D, H).astype(jnp.bfloat16)

    # Fold batch into the matmul M-dim: (B, S, H) -> (B*S, H).
    q2 = query.reshape(B * S, H).astype(jnp.bfloat16)
    k2 = key.reshape(B * S, H).astype(jnp.bfloat16)
    v2 = value.reshape(B * S, H).astype(jnp.bfloat16)

    m_blk = batch_block * S
    grid = (B // batch_block,)

    qkv_spec = pl.BlockSpec((m_blk, H), lambda i: (i, 0))
    # Constant index_map -> weights stay VMEM-resident across the grid.
    w_spec = pl.BlockSpec((H, H), lambda i: (0, 0))
    out_spec = pl.BlockSpec((m_blk, H), lambda i: (i, 0))

    out_shapes = [jax.ShapeDtypeStruct((B * S, H), jnp.float32)]
    out_specs = [out_spec]
    if need_weights:
        out_shapes.append(jax.ShapeDtypeStruct((B, n_head, S, S), jnp.float32))
        out_specs.append(pl.BlockSpec((batch_block, n_head, S, S),
                                      lambda i: (i, 0, 0, 0)))

    kernel = functools.partial(_mha_kernel, n_head=n_head, d_head=D, seq_len=S,
                               batch_block=batch_block,
                               need_weights=need_weights)

    results = pl.pallas_call(
        kernel,
        out_shape=tuple(out_shapes),
        grid_spec=pltpu.PrefetchScalarGridSpec(
            num_scalar_prefetch=0,
            grid=grid,
            in_specs=[qkv_spec, qkv_spec, qkv_spec,
                      w_spec, w_spec, w_spec, w_spec],
            out_specs=tuple(out_specs),
            scratch_shapes=[pltpu.VMEM((m_blk, H), jnp.float32)]),
        compiler_params=pltpu.CompilerParams(
            dimension_semantics=("parallel",)),
    )(q2, k2, v2, wq_all, wk_all, wv_all, wo_full)

    if need_weights:
        output_flat, attn = results
    else:
        (output_flat,) = results
        attn = None
    return output_flat.reshape(B, S, H), attn


def _reference(query, key, value, wq, wk, wv, wo_stacked):
    """Plain-JAX f32 reference mirroring the PyTorch forward (dropout = identity)."""
    n_head, H, D = wq.shape
    scale = np.sqrt(D)
    outs, attns = [], []
    for h in range(n_head):
        q = query @ wq[h]
        k = key @ wk[h]
        v = value @ wv[h]
        scores = jnp.einsum("bqd,bkd->bqk", q, k) / scale
        attn = jax.nn.softmax(scores, axis=-1)
        attns.append(attn)
        outs.append(jnp.einsum("bqk,bkd->bqd", attn, v))
    concat = jnp.concatenate(outs, axis=-1)            # (B, S, H)
    wo_full = wo_stacked.reshape(n_head * D, H)        # (H, H)
    output = concat @ wo_full
    return output, jnp.stack(attns, axis=1)            # (B, n_head, S, S)


if __name__ == "__main__":
    # Small shapes consistent with the module: hidden_dim=32, n_head=4 -> D=8
    B, S, H, n_head = 2, 8, 32, 4
    D = H // n_head

    key0 = jax.random.PRNGKey(0)
    k_q, k_k, k_v, k_wq, k_wk, k_wv, k_wo = jax.random.split(key0, 7)

    query = jax.random.normal(k_q, (B, S, H), dtype=jnp.float32)
    key_in = jax.random.normal(k_k, (B, S, H), dtype=jnp.float32)
    value = jax.random.normal(k_v, (B, S, H), dtype=jnp.float32)

    # Deterministic "xavier-like" weight init (init_weight stand-in).
    def init(k, shape, fan_in, fan_out):
        bound = np.sqrt(6.0 / (fan_in + fan_out))
        return jax.random.uniform(k, shape, jnp.float32, -bound, bound)

    wq = init(k_wq, (n_head, H, D), H, D)
    wk = init(k_wk, (n_head, H, D), H, D)
    wv = init(k_wv, (n_head, H, D), H, D)
    # o_w: Linear(H, H, bias=False) -> stacked per head as (n_head, D, H)
    wo_stacked = init(k_wo, (n_head, D, H), H, H)

    out, attn = multi_head_attention(query, key_in, value, wq, wk, wv, wo_stacked)
    jax.block_until_ready(out)
    jax.block_until_ready(attn)

    out_ref, attn_ref = _reference(query, key_in, value, wq, wk, wv, wo_stacked)
    # Kernel uses bf16 MXU operands (f32 accumulation), so compare against the
    # pure-f32 reference with mixed-precision tolerances.
    np.testing.assert_allclose(np.asarray(out), np.asarray(out_ref),
                               rtol=5e-2, atol=5e-2)
    np.testing.assert_allclose(np.asarray(attn), np.asarray(attn_ref),
                               rtol=5e-2, atol=5e-2)

    # need_weights=False path: scores neither computed as an output nor stored.
    out_nw, attn_nw = multi_head_attention(query, key_in, value, wq, wk, wv,
                                           wo_stacked, need_weights=False)
    jax.block_until_ready(out_nw)
    assert attn_nw is None
    np.testing.assert_allclose(np.asarray(out_nw), np.asarray(out_ref),
                               rtol=5e-2, atol=5e-2)

    print("KERNEL_OK")
</pallas_src>

<mosaic_0001>
module attributes {stable_mosaic.version = 11 : i64} {
  func.func @_mha_kernel(%arg0: i32, %arg1: memref<16x32xbf16, #tpu.memory_space<vmem>>, %arg2: memref<16x32xbf16, #tpu.memory_space<vmem>>, %arg3: memref<16x32xbf16, #tpu.memory_space<vmem>>, %arg4: memref<32x32xbf16, #tpu.memory_space<vmem>>, %arg5: memref<32x32xbf16, #tpu.memory_space<vmem>>, %arg6: memref<32x32xbf16, #tpu.memory_space<vmem>>, %arg7: memref<32x32xbf16, #tpu.memory_space<vmem>>, %arg8: memref<16x32xf32, #tpu.memory_space<vmem>>, %arg9: memref<2x4x8x8xf32, #tpu.memory_space<vmem>>, %arg10: memref<16x32xf32, #tpu.memory_space<vmem>>) attributes {dimension_semantics = [#tpu.dimension_semantics<parallel>], iteration_bounds = array<i64: 1>, scalar_prefetch = 0 : i64, scratch_operands = 1 : i64, tpu.core_type = #tpu.core_type<tc>, window_params = [{transform_indices = @transform_0, window_bounds = array<i64: 16, 32>}, {transform_indices = @transform_1, window_bounds = array<i64: 16, 32>}, {transform_indices = @transform_2, window_bounds = array<i64: 16, 32>}, {pipeline_mode = #tpu.pipeline_mode<synchronous>, transform_indices = @transform_3, window_bounds = array<i64: 32, 32>}, {pipeline_mode = #tpu.pipeline_mode<synchronous>, transform_indices = @transform_4, window_bounds = array<i64: 32, 32>}, {pipeline_mode = #tpu.pipeline_mode<synchronous>, transform_indices = @transform_5, window_bounds = array<i64: 32, 32>}, {pipeline_mode = #tpu.pipeline_mode<synchronous>, transform_indices = @transform_6, window_bounds = array<i64: 32, 32>}, {transform_indices = @transform_7, window_bounds = array<i64: 16, 32>}, {transform_indices = @transform_8, window_bounds = array<i64: 2, 4, 8, 8>}]} {
    %c0 = arith.constant 0 : index
    %c0_0 = arith.constant 0 : index
    %0 = vector.load %arg1[%c0, %c0_0] : memref<16x32xbf16, #tpu.memory_space<vmem>>, vector<16x32xbf16>
    %c0_1 = arith.constant 0 : index
    %c0_2 = arith.constant 0 : index
    %1 = vector.load %arg4[%c0_1, %c0_2] : memref<32x32xbf16, #tpu.memory_space<vmem>>, vector<32x32xbf16>
    %cst = arith.constant dense<0.000000e+00> : vector<16x32xf32>
    %2 = tpu.matmul %0, %1, %cst {dimension_numbers = #tpu.dot_dimension_numbers<[1], [0], [0], [1], [0, 0, 1, 1], [], []>} : vector<16x32xbf16>, vector<32x32xbf16>, vector<16x32xf32> -> vector<16x32xf32>
    %c0_3 = arith.constant 0 : index
    %c0_4 = arith.constant 0 : index
    %3 = vector.load %arg2[%c0_3, %c0_4] : memref<16x32xbf16, #tpu.memory_space<vmem>>, vector<16x32xbf16>
    %c0_5 = arith.constant 0 : index
    %c0_6 = arith.constant 0 : index
    %4 = vector.load %arg5[%c0_5, %c0_6] : memref<32x32xbf16, #tpu.memory_space<vmem>>, vector<32x32xbf16>
    %cst_7 = arith.constant dense<0.000000e+00> : vector<16x32xf32>
    %5 = tpu.matmul %3, %4, %cst_7 {dimension_numbers = #tpu.dot_dimension_numbers<[1], [0], [0], [1], [0, 0, 1, 1], [], []>} : vector<16x32xbf16>, vector<32x32xbf16>, vector<16x32xf32> -> vector<16x32xf32>
    %c0_8 = arith.constant 0 : index
    %c0_9 = arith.constant 0 : index
    %6 = vector.load %arg3[%c0_8, %c0_9] : memref<16x32xbf16, #tpu.memory_space<vmem>>, vector<16x32xbf16>
    %c0_10 = arith.constant 0 : index
    %c0_11 = arith.constant 0 : index
    %7 = vector.load %arg6[%c0_10, %c0_11] : memref<32x32xbf16, #tpu.memory_space<vmem>>, vector<32x32xbf16>
    %cst_12 = arith.constant dense<0.000000e+00> : vector<16x32xf32>
    %8 = tpu.matmul %6, %7, %cst_12 {dimension_numbers = #tpu.dot_dimension_numbers<[1], [0], [0], [1], [0, 0, 1, 1], [], []>} : vector<16x32xbf16>, vector<32x32xbf16>, vector<16x32xf32> -> vector<16x32xf32>
    %9 = arith.truncf %2 : vector<16x32xf32> to vector<16x32xbf16>
    %10 = arith.truncf %5 : vector<16x32xf32> to vector<16x32xbf16>
    %11 = arith.truncf %8 : vector<16x32xf32> to vector<16x32xbf16>
    %12 = vector.extract_strided_slice %9 {offsets = [0, 0], sizes = [8, 8], strides = [1, 1]} : vector<16x32xbf16> to vector<8x8xbf16>
    %13 = vector.extract_strided_slice %10 {offsets = [0, 0], sizes = [8, 8], strides = [1, 1]} : vector<16x32xbf16> to vector<8x8xbf16>
    %14 = vector.extract_strided_slice %11 {offsets = [0, 0], sizes = [8, 8], strides = [1, 1]} : vector<16x32xbf16> to vector<8x8xbf16>
    %cst_13 = arith.constant dense<0.000000e+00> : vector<8x8xf32>
    %15 = tpu.matmul %12, %13, %cst_13 {dimension_numbers = #tpu.dot_dimension_numbers<[1], [1], [0], [0], [0, 0, 1, 0], [], []>} : vector<8x8xbf16>, vector<8x8xbf16>, vector<8x8xf32> -> vector<8x8xf32>
    %cst_14 = arith.constant dense<0xFF800000> : vector<8xf32>
    %16 = vector.multi_reduction <maximumf>, %15, %cst_14 [1] : vector<8x8xf32> to vector<8xf32>
    %17 = vector.shape_cast %16 : vector<8xf32> to vector<8x1xf32>
    %18 = vector.broadcast %17 : vector<8x1xf32> to vector<8x8xf32>
    %19 = arith.subf %15, %18 : vector<8x8xf32>
    %20 = math.exp %19 : vector<8x8xf32>
    %cst_15 = arith.constant dense<0.000000e+00> : vector<8xf32>
    %21 = vector.multi_reduction <add>, %20, %cst_15 [1] : vector<8x8xf32> to vector<8xf32>
    %22 = vector.shape_cast %21 : vector<8xf32> to vector<8x1xf32>
    %23 = tpu.reciprocal %22 : vector<8x1xf32> -> vector<8x1xf32>
    %24 = vector.broadcast %23 : vector<8x1xf32> to vector<8x8xf32>
    %25 = arith.mulf %20, %24 : vector<8x8xf32>
    %c0_16 = arith.constant 0 : index
    %c0_17 = arith.constant 0 : index
    %c0_18 = arith.constant 0 : index
    %c0_19 = arith.constant 0 : index
    %26 = vector.load %arg9[%c0_16, %c0_17, %c0_18, %c0_19] : memref<2x4x8x8xf32, #tpu.memory_space<vmem>>, vector<1x1x8x8xf32>
    %27 = vector.shape_cast %26 : vector<1x1x8x8xf32> to vector<8x8xf32>
    %28 = vector.shape_cast %25 : vector<8x8xf32> to vector<1x1x8x8xf32>
    tpu.vector_store %arg9[%c0_16, %c0_17, %c0_18, %c0_19], %28 {strides = array<i32>} : memref<2x4x8x8xf32, #tpu.memory_space<vmem>>, vector<1x1x8x8xf32>,
    %29 = arith.truncf %25 : vector<8x8xf32> to vector<8x8xbf16>
    %cst_20 = arith.constant dense<0.000000e+00> : vector<8x8xf32>
    %30 = tpu.matmul %29, %14, %cst_20 {dimension_numbers = #tpu.dot_dimension_numbers<[1], [0], [0], [1], [0, 0, 1, 1], [], []>} : vector<8x8xbf16>, vector<8x8xbf16>, vector<8x8xf32> -> vector<8x8xf32>
    %c0_21 = arith.constant 0 : index
    %c0_22 = arith.constant 0 : index
    %31 = vector.load %arg10[%c0_21, %c0_22] : memref<16x32xf32, #tpu.memory_space<vmem>>, vector<8x8xf32>
    tpu.vector_store %arg10[%c0_21, %c0_22], %30 {strides = array<i32>} : memref<16x32xf32, #tpu.memory_space<vmem>>, vector<8x8xf32>,
    %32 = vector.extract_strided_slice %9 {offsets = [0, 8], sizes = [8, 8], strides = [1, 1]} : vector<16x32xbf16> to vector<8x8xbf16>
    %33 = vector.extract_strided_slice %10 {offsets = [0, 8], sizes = [8, 8], strides = [1, 1]} : vector<16x32xbf16> to vector<8x8xbf16>
    %34 = vector.extract_strided_slice %11 {offsets = [0, 8], sizes = [8, 8], strides = [1, 1]} : vector<16x32xbf16> to vector<8x8xbf16>
    %cst_23 = arith.constant dense<0.000000e+00> : vector<8x8xf32>
    %35 = tpu.matmul %32, %33, %cst_23 {dimension_numbers = #tpu.dot_dimension_numbers<[1], [1], [0], [0], [0, 0, 1, 0], [], []>} : vector<8x8xbf16>, vector<8x8xbf16>, vector<8x8xf32> -> vector<8x8xf32>
    %cst_24 = arith.constant dense<0xFF800000> : vector<8xf32>
    %36 = vector.multi_reduction <maximumf>, %35, %cst_24 [1] : vector<8x8xf32> to vector<8xf32>
    %37 = vector.shape_cast %36 : vector<8xf32> to vector<8x1xf32>
    %38 = vector.broadcast %37 : vector<8x1xf32> to vector<8x8xf32>
    %39 = arith.subf %35, %38 : vector<8x8xf32>
    %40 = math.exp %39 : vector<8x8xf32>
    %cst_25 = arith.constant dense<0.000000e+00> : vector<8xf32>
    %41 = vector.multi_reduction <add>, %40, %cst_25 [1] : vector<8x8xf32> to vector<8xf32>
    %42 = vector.shape_cast %41 : vector<8xf32> to vector<8x1xf32>
    %43 = tpu.reciprocal %42 : vector<8x1xf32> -> vector<8x1xf32>
    %44 = vector.broadcast %43 : vector<8x1xf32> to vector<8x8xf32>
    %45 = arith.mulf %40, %44 : vector<8x8xf32>
    %c0_26 = arith.constant 0 : index
    %c1 = arith.constant 1 : index
    %c0_27 = arith.constant 0 : index
    %c0_28 = arith.constant 0 : index
    %46 = vector.load %arg9[%c0_26, %c1, %c0_27, %c0_28] : memref<2x4x8x8xf32, #tpu.memory_space<vmem>>, vector<1x1x8x8xf32>
    %47 = vector.shape_cast %46 : vector<1x1x8x8xf32> to vector<8x8xf32>
    %48 = vector.shape_cast %45 : vector<8x8xf32> to vector<1x1x8x8xf32>
    tpu.vector_store %arg9[%c0_26, %c1, %c0_27, %c0_28], %48 {strides = array<i32>} : memref<2x4x8x8xf32, #tpu.memory_space<vmem>>, vector<1x1x8x8xf32>,
    %49 = arith.truncf %45 : vector<8x8xf32> to vector<8x8xbf16>
    %cst_29 = arith.constant dense<0.000000e+00> : vector<8x8xf32>
    %50 = tpu.matmul %49, %34, %cst_29 {dimension_numbers = #tpu.dot_dimension_numbers<[1], [0], [0], [1], [0, 0, 1, 1], [], []>} : vector<8x8xbf16>, vector<8x8xbf16>, vector<8x8xf32> -> vector<8x8xf32>
    %c0_30 = arith.constant 0 : index
    %c8 = arith.constant 8 : index
    %51 = vector.load %arg10[%c0_30, %c8] : memref<16x32xf32, #tpu.memory_space<vmem>>, vector<8x8xf32>
    tpu.vector_store %arg10[%c0_30, %c8], %50 {strides = array<i32>} : memref<16x32xf32, #tpu.memory_space<vmem>>, vector<8x8xf32>,
    %52 = vector.extract_strided_slice %9 {offsets = [0, 16], sizes = [8, 8], strides = [1, 1]} : vector<16x32xbf16> to vector<8x8xbf16>
    %53 = vector.extract_strided_slice %10 {offsets = [0, 16], sizes = [8, 8], strides = [1, 1]} : vector<16x32xbf16> to vector<8x8xbf16>
    %54 = vector.extract_strided_slice %11 {offsets = [0, 16], sizes = [8, 8], strides = [1, 1]} : vector<16x32xbf16> to vector<8x8xbf16>
    %cst_31 = arith.constant dense<0.000000e+00> : vector<8x8xf32>
    %55 = tpu.matmul %52, %53, %cst_31 {dimension_numbers = #tpu.dot_dimension_numbers<[1], [1], [0], [0], [0, 0, 1, 0], [], []>} : vector<8x8xbf16>, vector<8x8xbf16>, vector<8x8xf32> -> vector<8x8xf32>
    %cst_32 = arith.constant dense<0xFF800000> : vector<8xf32>
    %56 = vector.multi_reduction <maximumf>, %55, %cst_32 [1] : vector<8x8xf32> to vector<8xf32>
    %57 = vector.shape_cast %56 : vector<8xf32> to vector<8x1xf32>
    %58 = vector.broadcast %57 : vector<8x1xf32> to vector<8x8xf32>
    %59 = arith.subf %55, %58 : vector<8x8xf32>
    %60 = math.exp %59 : vector<8x8xf32>
    %cst_33 = arith.constant dense<0.000000e+00> : vector<8xf32>
    %61 = vector.multi_reduction <add>, %60, %cst_33 [1] : vector<8x8xf32> to vector<8xf32>
    %62 = vector.shape_cast %61 : vector<8xf32> to vector<8x1xf32>
    %63 = tpu.reciprocal %62 : vector<8x1xf32> -> vector<8x1xf32>
    %64 = vector.broadcast %63 : vector<8x1xf32> to vector<8x8xf32>
    %65 = arith.mulf %60, %64 : vector<8x8xf32>
    %c0_34 = arith.constant 0 : index
    %c2 = arith.constant 2 : index
    %c0_35 = arith.constant 0 : index
    %c0_36 = arith.constant 0 : index
    %66 = vector.load %arg9[%c0_34, %c2, %c0_35, %c0_36] : memref<2x4x8x8xf32, #tpu.memory_space<vmem>>, vector<1x1x8x8xf32>
    %67 = vector.shape_cast %66 : vector<1x1x8x8xf32> to vector<8x8xf32>
    %68 = vector.shape_cast %65 : vector<8x8xf32> to vector<1x1x8x8xf32>
    tpu.vector_store %arg9[%c0_34, %c2, %c0_35, %c0_36], %68 {strides = array<i32>} : memref<2x4x8x8xf32, #tpu.memory_space<vmem>>, vector<1x1x8x8xf32>,
    %69 = arith.truncf %65 : vector<8x8xf32> to vector<8x8xbf16>
    %cst_37 = arith.constant dense<0.000000e+00> : vector<8x8xf32>
    %70 = tpu.matmul %69, %54, %cst_37 {dimension_numbers = #tpu.dot_dimension_numbers<[1], [0], [0], [1], [0, 0, 1, 1], [], []>} : vector<8x8xbf16>, vector<8x8xbf16>, vector<8x8xf32> -> vector<8x8xf32>
    %c0_38 = arith.constant 0 : index
    %c16 = arith.constant 16 : index
    %71 = vector.load %arg10[%c0_38, %c16] : memref<16x32xf32, #tpu.memory_space<vmem>>, vector<8x8xf32>
    tpu.vector_store %arg10[%c0_38, %c16], %70 {strides = array<i32>} : memref<16x32xf32, #tpu.memory_space<vmem>>, vector<8x8xf32>,
    %72 = vector.extract_strided_slice %9 {offsets = [0, 24], sizes = [8, 8], strides = [1, 1]} : vector<16x32xbf16> to vector<8x8xbf16>
    %73 = vector.extract_strided_slice %10 {offsets = [0, 24], sizes = [8, 8], strides = [1, 1]} : vector<16x32xbf16> to vector<8x8xbf16>
    %74 = vector.extract_strided_slice %11 {offsets = [0, 24], sizes = [8, 8], strides = [1, 1]} : vector<16x32xbf16> to vector<8x8xbf16>
    %cst_39 = arith.constant dense<0.000000e+00> : vector<8x8xf32>
    %75 = tpu.matmul %72, %73, %cst_39 {dimension_numbers = #tpu.dot_dimension_numbers<[1], [1], [0], [0], [0, 0, 1, 0], [], []>} : vector<8x8xbf16>, vector<8x8xbf16>, vector<8x8xf32> -> vector<8x8xf32>
    %cst_40 = arith.constant dense<0xFF800000> : vector<8xf32>
    %76 = vector.multi_reduction <maximumf>, %75, %cst_40 [1] : vector<8x8xf32> to vector<8xf32>
    %77 = vector.shape_cast %76 : vector<8xf32> to vector<8x1xf32>
    %78 = vector.broadcast %77 : vector<8x1xf32> to vector<8x8xf32>
    %79 = arith.subf %75, %78 : vector<8x8xf32>
    %80 = math.exp %79 : vector<8x8xf32>
    %cst_41 = arith.constant dense<0.000000e+00> : vector<8xf32>
    %81 = vector.multi_reduction <add>, %80, %cst_41 [1] : vector<8x8xf32> to vector<8xf32>
    %82 = vector.shape_cast %81 : vector<8xf32> to vector<8x1xf32>
    %83 = tpu.reciprocal %82 : vector<8x1xf32> -> vector<8x1xf32>
    %84 = vector.broadcast %83 : vector<8x1xf32> to vector<8x8xf32>
    %85 = arith.mulf %80, %84 : vector<8x8xf32>
    %c0_42 = arith.constant 0 : index
    %c3 = arith.constant 3 : index
    %c0_43 = arith.constant 0 : index
    %c0_44 = arith.constant 0 : index
    %86 = vector.load %arg9[%c0_42, %c3, %c0_43, %c0_44] : memref<2x4x8x8xf32, #tpu.memory_space<vmem>>, vector<1x1x8x8xf32>
    %87 = vector.shape_cast %86 : vector<1x1x8x8xf32> to vector<8x8xf32>
    %88 = vector.shape_cast %85 : vector<8x8xf32> to vector<1x1x8x8xf32>
    tpu.vector_store %arg9[%c0_42, %c3, %c0_43, %c0_44], %88 {strides = array<i32>} : memref<2x4x8x8xf32, #tpu.memory_space<vmem>>, vector<1x1x8x8xf32>,
    %89 = arith.truncf %85 : vector<8x8xf32> to vector<8x8xbf16>
    %cst_45 = arith.constant dense<0.000000e+00> : vector<8x8xf32>
    %90 = tpu.matmul %89, %74, %cst_45 {dimension_numbers = #tpu.dot_dimension_numbers<[1], [0], [0], [1], [0, 0, 1, 1], [], []>} : vector<8x8xbf16>, vector<8x8xbf16>, vector<8x8xf32> -> vector<8x8xf32>
    %c0_46 = arith.constant 0 : index
    %c24 = arith.constant 24 : index
    %91 = vector.load %arg10[%c0_46, %c24] : memref<16x32xf32, #tpu.memory_space<vmem>>, vector<8x8xf32>
    tpu.vector_store %arg10[%c0_46, %c24], %90 {strides = array<i32>} : memref<16x32xf32, #tpu.memory_space<vmem>>, vector<8x8xf32>,
    %92 = vector.extract_strided_slice %9 {offsets = [8, 0], sizes = [8, 8], strides = [1, 1]} : vector<16x32xbf16> to vector<8x8xbf16>
    %93 = vector.extract_strided_slice %10 {offsets = [8, 0], sizes = [8, 8], strides = [1, 1]} : vector<16x32xbf16> to vector<8x8xbf16>
    %94 = vector.extract_strided_slice %11 {offsets = [8, 0], sizes = [8, 8], strides = [1, 1]} : vector<16x32xbf16> to vector<8x8xbf16>
    %cst_47 = arith.constant dense<0.000000e+00> : vector<8x8xf32>
    %95 = tpu.matmul %92, %93, %cst_47 {dimension_numbers = #tpu.dot_dimension_numbers<[1], [1], [0], [0], [0, 0, 1, 0], [], []>} : vector<8x8xbf16>, vector<8x8xbf16>, vector<8x8xf32> -> vector<8x8xf32>
    %cst_48 = arith.constant dense<0xFF800000> : vector<8xf32>
    %96 = vector.multi_reduction <maximumf>, %95, %cst_48 [1] : vector<8x8xf32> to vector<8xf32>
    %97 = vector.shape_cast %96 : vector<8xf32> to vector<8x1xf32>
    %98 = vector.broadcast %97 : vector<8x1xf32> to vector<8x8xf32>
    %99 = arith.subf %95, %98 : vector<8x8xf32>
    %100 = math.exp %99 : vector<8x8xf32>
    %cst_49 = arith.constant dense<0.000000e+00> : vector<8xf32>
    %101 = vector.multi_reduction <add>, %100, %cst_49 [1] : vector<8x8xf32> to vector<8xf32>
    %102 = vector.shape_cast %101 : vector<8xf32> to vector<8x1xf32>
    %103 = tpu.reciprocal %102 : vector<8x1xf32> -> vector<8x1xf32>
    %104 = vector.broadcast %103 : vector<8x1xf32> to vector<8x8xf32>
    %105 = arith.mulf %100, %104 : vector<8x8xf32>
    %c1_50 = arith.constant 1 : index
    %c0_51 = arith.constant 0 : index
    %c0_52 = arith.constant 0 : index
    %c0_53 = arith.constant 0 : index
    %106 = vector.load %arg9[%c1_50, %c0_51, %c0_52, %c0_53] : memref<2x4x8x8xf32, #tpu.memory_space<vmem>>, vector<1x1x8x8xf32>
    %107 = vector.shape_cast %106 : vector<1x1x8x8xf32> to vector<8x8xf32>
    %108 = vector.shape_cast %105 : vector<8x8xf32> to vector<1x1x8x8xf32>
    tpu.vector_store %arg9[%c1_50, %c0_51, %c0_52, %c0_53], %108 {strides = array<i32>} : memref<2x4x8x8xf32, #tpu.memory_space<vmem>>, vector<1x1x8x8xf32>,
    %109 = arith.truncf %105 : vector<8x8xf32> to vector<8x8xbf16>
    %cst_54 = arith.constant dense<0.000000e+00> : vector<8x8xf32>
    %110 = tpu.matmul %109, %94, %cst_54 {dimension_numbers = #tpu.dot_dimension_numbers<[1], [0], [0], [1], [0, 0, 1, 1], [], []>} : vector<8x8xbf16>, vector<8x8xbf16>, vector<8x8xf32> -> vector<8x8xf32>
    %c8_55 = arith.constant 8 : index
    %c0_56 = arith.constant 0 : index
    %111 = vector.load %arg10[%c8_55, %c0_56] : memref<16x32xf32, #tpu.memory_space<vmem>>, vector<8x8xf32>
    tpu.vector_store %arg10[%c8_55, %c0_56], %110 {strides = array<i32>} : memref<16x32xf32, #tpu.memory_space<vmem>>, vector<8x8xf32>,
    %112 = vector.extract_strided_slice %9 {offsets = [8, 8], sizes = [8, 8], strides = [1, 1]} : vector<16x32xbf16> to vector<8x8xbf16>
    %113 = vector.extract_strided_slice %10 {offsets = [8, 8], sizes = [8, 8], strides = [1, 1]} : vector<16x32xbf16> to vector<8x8xbf16>
    %114 = vector.extract_strided_slice %11 {offsets = [8, 8], sizes = [8, 8], strides = [1, 1]} : vector<16x32xbf16> to vector<8x8xbf16>
    %cst_57 = arith.constant dense<0.000000e+00> : vector<8x8xf32>
    %115 = tpu.matmul %112, %113, %cst_57 {dimension_numbers = #tpu.dot_dimension_numbers<[1], [1], [0], [0], [0, 0, 1, 0], [], []>} : vector<8x8xbf16>, vector<8x8xbf16>, vector<8x8xf32> -> vector<8x8xf32>
    %cst_58 = arith.constant dense<0xFF800000> : vector<8xf32>
    %116 = vector.multi_reduction <maximumf>, %115, %cst_58 [1] : vector<8x8xf32> to vector<8xf32>
    %117 = vector.shape_cast %116 : vector<8xf32> to vector<8x1xf32>
    %118 = vector.broadcast %117 : vector<8x1xf32> to vector<8x8xf32>
    %119 = arith.subf %115, %118 : vector<8x8xf32>
    %120 = math.exp %119 : vector<8x8xf32>
    %cst_59 = arith.constant dense<0.000000e+00> : vector<8xf32>
    %121 = vector.multi_reduction <add>, %120, %cst_59 [1] : vector<8x8xf32> to vector<8xf32>
    %122 = vector.shape_cast %121 : vector<8xf32> to vector<8x1xf32>
    %123 = tpu.reciprocal %122 : vector<8x1xf32> -> vector<8x1xf32>
    %124 = vector.broadcast %123 : vector<8x1xf32> to vector<8x8xf32>
    %125 = arith.mulf %120, %124 : vector<8x8xf32>
    %c1_60 = arith.constant 1 : index
    %c1_61 = arith.constant 1 : index
    %c0_62 = arith.constant 0 : index
    %c0_63 = arith.constant 0 : index
    %126 = vector.load %arg9[%c1_60, %c1_61, %c0_62, %c0_63] : memref<2x4x8x8xf32, #tpu.memory_space<vmem>>, vector<1x1x8x8xf32>
    %127 = vector.shape_cast %126 : vector<1x1x8x8xf32> to vector<8x8xf32>
    %128 = vector.shape_cast %125 : vector<8x8xf32> to vector<1x1x8x8xf32>
    tpu.vector_store %arg9[%c1_60, %c1_61, %c0_62, %c0_63], %128 {strides = array<i32>} : memref<2x4x8x8xf32, #tpu.memory_space<vmem>>, vector<1x1x8x8xf32>,
    %129 = arith.truncf %125 : vector<8x8xf32> to vector<8x8xbf16>
    %cst_64 = arith.constant dense<0.000000e+00> : vector<8x8xf32>
    %130 = tpu.matmul %129, %114, %cst_64 {dimension_numbers = #tpu.dot_dimension_numbers<[1], [0], [0], [1], [0, 0, 1, 1], [], []>} : vector<8x8xbf16>, vector<8x8xbf16>, vector<8x8xf32> -> vector<8x8xf32>
    %c8_65 = arith.constant 8 : index
    %c8_66 = arith.constant 8 : index
    %131 = vector.load %arg10[%c8_65, %c8_66] : memref<16x32xf32, #tpu.memory_space<vmem>>, vector<8x8xf32>
    tpu.vector_store %arg10[%c8_65, %c8_66], %130 {strides = array<i32>} : memref<16x32xf32, #tpu.memory_space<vmem>>, vector<8x8xf32>,
    %132 = vector.extract_strided_slice %9 {offsets = [8, 16], sizes = [8, 8], strides = [1, 1]} : vector<16x32xbf16> to vector<8x8xbf16>
    %133 = vector.extract_strided_slice %10 {offsets = [8, 16], sizes = [8, 8], strides = [1, 1]} : vector<16x32xbf16> to vector<8x8xbf16>
    %134 = vector.extract_strided_slice %11 {offsets = [8, 16], sizes = [8, 8], strides = [1, 1]} : vector<16x32xbf16> to vector<8x8xbf16>
    %cst_67 = arith.constant dense<0.000000e+00> : vector<8x8xf32>
    %135 = tpu.matmul %132, %133, %cst_67 {dimension_numbers = #tpu.dot_dimension_numbers<[1], [1], [0], [0], [0, 0, 1, 0], [], []>} : vector<8x8xbf16>, vector<8x8xbf16>, vector<8x8xf32> -> vector<8x8xf32>
    %cst_68 = arith.constant dense<0xFF800000> : vector<8xf32>
    %136 = vector.multi_reduction <maximumf>, %135, %cst_68 [1] : vector<8x8xf32> to vector<8xf32>
    %137 = vector.shape_cast %136 : vector<8xf32> to vector<8x1xf32>
    %138 = vector.broadcast %137 : vector<8x1xf32> to vector<8x8xf32>
    %139 = arith.subf %135, %138 : vector<8x8xf32>
    %140 = math.exp %139 : vector<8x8xf32>
    %cst_69 = arith.constant dense<0.000000e+00> : vector<8xf32>
    %141 = vector.multi_reduction <add>, %140, %cst_69 [1] : vector<8x8xf32> to vector<8xf32>
    %142 = vector.shape_cast %141 : vector<8xf32> to vector<8x1xf32>
    %143 = tpu.reciprocal %142 : vector<8x1xf32> -> vector<8x1xf32>
    %144 = vector.broadcast %143 : vector<8x1xf32> to vector<8x8xf32>
    %145 = arith.mulf %140, %144 : vector<8x8xf32>
    %c1_70 = arith.constant 1 : index
    %c2_71 = arith.constant 2 : index
    %c0_72 = arith.constant 0 : index
    %c0_73 = arith.constant 0 : index
    %146 = vector.load %arg9[%c1_70, %c2_71, %c0_72, %c0_73] : memref<2x4x8x8xf32, #tpu.memory_space<vmem>>, vector<1x1x8x8xf32>
    %147 = vector.shape_cast %146 : vector<1x1x8x8xf32> to vector<8x8xf32>
    %148 = vector.shape_cast %145 : vector<8x8xf32> to vector<1x1x8x8xf32>
    tpu.vector_store %arg9[%c1_70, %c2_71, %c0_72, %c0_73], %148 {strides = array<i32>} : memref<2x4x8x8xf32, #tpu.memory_space<vmem>>, vector<1x1x8x8xf32>,
    %149 = arith.truncf %145 : vector<8x8xf32> to vector<8x8xbf16>
    %cst_74 = arith.constant dense<0.000000e+00> : vector<8x8xf32>
    %150 = tpu.matmul %149, %134, %cst_74 {dimension_numbers = #tpu.dot_dimension_numbers<[1], [0], [0], [1], [0, 0, 1, 1], [], []>} : vector<8x8xbf16>, vector<8x8xbf16>, vector<8x8xf32> -> vector<8x8xf32>
    %c8_75 = arith.constant 8 : index
    %c16_76 = arith.constant 16 : index
    %151 = vector.load %arg10[%c8_75, %c16_76] : memref<16x32xf32, #tpu.memory_space<vmem>>, vector<8x8xf32>
    tpu.vector_store %arg10[%c8_75, %c16_76], %150 {strides = array<i32>} : memref<16x32xf32, #tpu.memory_space<vmem>>, vector<8x8xf32>,
    %152 = vector.extract_strided_slice %9 {offsets = [8, 24], sizes = [8, 8], strides = [1, 1]} : vector<16x32xbf16> to vector<8x8xbf16>
    %153 = vector.extract_strided_slice %10 {offsets = [8, 24], sizes = [8, 8], strides = [1, 1]} : vector<16x32xbf16> to vector<8x8xbf16>
    %154 = vector.extract_strided_slice %11 {offsets = [8, 24], sizes = [8, 8], strides = [1, 1]} : vector<16x32xbf16> to vector<8x8xbf16>
    %cst_77 = arith.constant dense<0.000000e+00> : vector<8x8xf32>
    %155 = tpu.matmul %152, %153, %cst_77 {dimension_numbers = #tpu.dot_dimension_numbers<[1], [1], [0], [0], [0, 0, 1, 0], [], []>} : vector<8x8xbf16>, vector<8x8xbf16>, vector<8x8xf32> -> vector<8x8xf32>
    %cst_78 = arith.constant dense<0xFF800000> : vector<8xf32>
    %156 = vector.multi_reduction <maximumf>, %155, %cst_78 [1] : vector<8x8xf32> to vector<8xf32>
    %157 = vector.shape_cast %156 : vector<8xf32> to vector<8x1xf32>
    %158 = vector.broadcast %157 : vector<8x1xf32> to vector<8x8xf32>
    %159 = arith.subf %155, %158 : vector<8x8xf32>
    %160 = math.exp %159 : vector<8x8xf32>
    %cst_79 = arith.constant dense<0.000000e+00> : vector<8xf32>
    %161 = vector.multi_reduction <add>, %160, %cst_79 [1] : vector<8x8xf32> to vector<8xf32>
    %162 = vector.shape_cast %161 : vector<8xf32> to vector<8x1xf32>
    %163 = tpu.reciprocal %162 : vector<8x1xf32> -> vector<8x1xf32>
    %164 = vector.broadcast %163 : vector<8x1xf32> to vector<8x8xf32>
    %165 = arith.mulf %160, %164 : vector<8x8xf32>
    %c1_80 = arith.constant 1 : index
    %c3_81 = arith.constant 3 : index
    %c0_82 = arith.constant 0 : index
    %c0_83 = arith.constant 0 : index
    %166 = vector.load %arg9[%c1_80, %c3_81, %c0_82, %c0_83] : memref<2x4x8x8xf32, #tpu.memory_space<vmem>>, vector<1x1x8x8xf32>
    %167 = vector.shape_cast %166 : vector<1x1x8x8xf32> to vector<8x8xf32>
    %168 = vector.shape_cast %165 : vector<8x8xf32> to vector<1x1x8x8xf32>
    tpu.vector_store %arg9[%c1_80, %c3_81, %c0_82, %c0_83], %168 {strides = array<i32>} : memref<2x4x8x8xf32, #tpu.memory_space<vmem>>, vector<1x1x8x8xf32>,
    %169 = arith.truncf %165 : vector<8x8xf32> to vector<8x8xbf16>
    %cst_84 = arith.constant dense<0.000000e+00> : vector<8x8xf32>
    %170 = tpu.matmul %169, %154, %cst_84 {dimension_numbers = #tpu.dot_dimension_numbers<[1], [0], [0], [1], [0, 0, 1, 1], [], []>} : vector<8x8xbf16>, vector<8x8xbf16>, vector<8x8xf32> -> vector<8x8xf32>
    %c8_85 = arith.constant 8 : index
    %c24_86 = arith.constant 24 : index
    %171 = vector.load %arg10[%c8_85, %c24_86] : memref<16x32xf32, #tpu.memory_space<vmem>>, vector<8x8xf32>
    tpu.vector_store %arg10[%c8_85, %c24_86], %170 {strides = array<i32>} : memref<16x32xf32, #tpu.memory_space<vmem>>, vector<8x8xf32>,
    %c0_87 = arith.constant 0 : index
    %c0_88 = arith.constant 0 : index
    %172 = vector.load %arg10[%c0_87, %c0_88] : memref<16x32xf32, #tpu.memory_space<vmem>>, vector<16x32xf32>
    %173 = arith.truncf %172 : vector<16x32xf32> to vector<16x32xbf16>
    %c0_89 = arith.constant 0 : index
    %c0_90 = arith.constant 0 : index
    %174 = vector.load %arg7[%c0_89, %c0_90] : memref<32x32xbf16, #tpu.memory_space<vmem>>, vector<32x32xbf16>
    %cst_91 = arith.constant dense<0.000000e+00> : vector<16x32xf32>
    %175 = tpu.matmul %173, %174, %cst_91 {dimension_numbers = #tpu.dot_dimension_numbers<[1], [0], [0], [1], [0, 0, 1, 1], [], []>} : vector<16x32xbf16>, vector<32x32xbf16>, vector<16x32xf32> -> vector<16x32xf32>
    %c0_92 = arith.constant 0 : index
    %c0_93 = arith.constant 0 : index
    %176 = vector.load %arg8[%c0_92, %c0_93] : memref<16x32xf32, #tpu.memory_space<vmem>>, vector<16x32xf32>
    tpu.vector_store %arg8[%c0_92, %c0_93], %175 {strides = array<i32>} : memref<16x32xf32, #tpu.memory_space<vmem>>, vector<16x32xf32>,
    return
  }
  func.func @transform_0(%arg0: i32) -> (i32, i32) {
    %c0_i32 = arith.constant 0 : i32
    %c0_i32_0 = arith.constant 0 : i32
    return %arg0, %c0_i32 : i32, i32
  }
  func.func @transform_1(%arg0: i32) -> (i32, i32) {
    %c0_i32 = arith.constant 0 : i32
    %c0_i32_0 = arith.constant 0 : i32
    return %arg0, %c0_i32 : i32, i32
  }
  func.func @transform_2(%arg0: i32) -> (i32, i32) {
    %c0_i32 = arith.constant 0 : i32
    %c0_i32_0 = arith.constant 0 : i32
    return %arg0, %c0_i32 : i32, i32
  }
  func.func @transform_3(%arg0: i32) -> (i32, i32) {
    %c0_i32 = arith.constant 0 : i32
    %c0_i32_0 = arith.constant 0 : i32
    %c0_i32_1 = arith.constant 0 : i32
    return %c0_i32, %c0_i32_0 : i32, i32
  }
  func.func @transform_4(%arg0: i32) -> (i32, i32) {
    %c0_i32 = arith.constant 0 : i32
    %c0_i32_0 = arith.constant 0 : i32
    %c0_i32_1 = arith.constant 0 : i32
    return %c0_i32, %c0_i32_0 : i32, i32
  }
  func.func @transform_5(%arg0: i32) -> (i32, i32) {
    %c0_i32 = arith.constant 0 : i32
    %c0_i32_0 = arith.constant 0 : i32
    %c0_i32_1 = arith.constant 0 : i32
    return %c0_i32, %c0_i32_0 : i32, i32
  }
  func.func @transform_6(%arg0: i32) -> (i32, i32) {
    %c0_i32 = arith.constant 0 : i32
    %c0_i32_0 = arith.constant 0 : i32
    %c0_i32_1 = arith.constant 0 : i32
    return %c0_i32, %c0_i32_0 : i32, i32
  }
  func.func @transform_7(%arg0: i32) -> (i32, i32) {
    %c0_i32 = arith.constant 0 : i32
    %c0_i32_0 = arith.constant 0 : i32
    return %arg0, %c0_i32 : i32, i32
  }
  func.func @transform_8(%arg0: i32) -> (i32, i32, i32, i32) {
    %c0_i32 = arith.constant 0 : i32
    %c0_i32_0 = arith.constant 0 : i32
    %c0_i32_1 = arith.constant 0 : i32
    %c0_i32_2 = arith.constant 0 : i32
    return %arg0, %c0_i32, %c0_i32_0, %c0_i32_1 : i32, i32, i32, i32
  }
}

</mosaic_0001>

<llo_original>
// kernel: tpu_custom_call.1
$region0: #{tpu_custom_call.1}
  #allocation0 [shape = 'u32[]', space=smem, size = 0x4, offset = 0x4, fixed_abs, tag = 'smem constant byte address 0x4 - core index']
  #allocation1 [shape = 'u32[144,128]{1,0:T(1,128)}', space=vmem, size = 0x12000, scoped, tag = 'internal scratch']
  #allocation2 [shape = 'f32[16,32]{1,0:T(8,128)}', space=vmem, size = 0x2000, scoped, tag = 'scratch operand']
  %s0 = inlined_call_operand.hbm [shape: bf16[16,32], index: 0, kind: input, shape index: {}]
  %s1 = inlined_call_operand.hbm [shape: bf16[16,32], index: 1, kind: input, shape index: {}]
  %s2 = inlined_call_operand.hbm [shape: bf16[16,32], index: 2, kind: input, shape index: {}]
  %s3 = inlined_call_operand.hbm [shape: bf16[32,32], index: 3, kind: input, shape index: {}]
  %s4 = inlined_call_operand.hbm [shape: bf16[32,32], index: 4, kind: input, shape index: {}]
  %s5 = inlined_call_operand.vmem [shape: bf16[32,32], index: 5, kind: input, shape index: {}]
  %s6 = inlined_call_operand.hbm [shape: bf16[32,32], index: 6, kind: input, shape index: {}]
  %s7 = inlined_call_operand.hbm [shape: f32[16,32], index: 7, kind: output, shape index: {0}]
  %s8 = inlined_call_operand.hbm [shape: f32[2,4,8,8], index: 8, kind: output, shape index: {1}]
  %9 = xla_tuple %s7, %s8
  %s10 = sld [smem:[#allocation0]]
  $region70: #{tpu_custom_call.1} parent=0
    _
  %s12 = ssub.s32 1, %s10
  %s13 = scalar_select 0, %s12, %s10
  $region1: #{tpu_custom_call.1} parent=0
    #allocation3 [shape = 'u8[4096]{0}', space=vmem, size = 0x1000, scoped, tag = 'input window, operand 0, single buffered']
    #allocation4 [shape = 's32[1]{0}', space=sflag, size = 0x4, scoped, tag = 'scoped memory for tpu_custom_call.1']
    #allocation5 [shape = 's32[1]{0}', space=sflag, size = 0x4, scoped, tag = 'scoped memory for tpu_custom_call.1']
    #allocation6 [shape = 'u8[4096]{0}', space=vmem, size = 0x1000, scoped, tag = 'input window, operand 1, single buffered']
    #allocation7 [shape = 's32[1]{0}', space=sflag, size = 0x4, scoped, tag = 'scoped memory for tpu_custom_call.1']
    #allocation8 [shape = 'u8[4096]{0}', space=vmem, size = 0x1000, scoped, tag = 'input window, operand 2, single buffered']
    #allocation9 [shape = 'u8[8192]{0}', space=vmem, size = 0x2000, scoped, tag = 'input window, operand 3, single buffered']
    #allocation10 [shape = 's32[1]{0}', space=sflag, size = 0x4, scoped, tag = 'scoped memory for tpu_custom_call.1']
    #allocation11 [shape = 'u8[8192]{0}', space=vmem, size = 0x2000, scoped, tag = 'input window, operand 4, single buffered']
    #allocation12 [shape = 'u8[8192]{0}', space=vmem, size = 0x2000, scoped, tag = 'input window, operand 6, single buffered']
    #allocation13 [shape = 's32[1]{0}', space=sflag, size = 0x4, scoped, tag = 'scoped memory for tpu_custom_call.1']
    #allocation14 [shape = 'u8[8192]{0}', space=vmem, size = 0x2000, scoped, tag = 'output window, operand 0, single buffered']
    #allocation15 [shape = 'u8[32768]{0}', space=vmem, size = 0x8000, scoped, tag = 'output window, operand 1, single buffered']
    #allocation16 [shape = 's32[1]{0}', space=sflag, size = 0x4, scoped, tag = 'scoped memory for tpu_custom_call.1']
    %14 = vsyncpa [#allocation4], 0
    %15 = vsyncpa [#allocation7], 0
    %16 = vsyncpa [#allocation10], 0
    %17 = vsyncpa [#allocation13], 0
    %18 = vsyncpa [#allocation5], 0
    %19 = vsyncpa [#allocation16], 0
    // Predicated region
    $region2: #{tpu_custom_call.1} parent=1 // pred_check
      _
    $region3: #{tpu_custom_call.1} parent=1 // pred_check_branch
      %21 = sbr.rel (0) target = $region5
    $region4: #{tpu_custom_call.1} parent=1 // pred_region
      %s23 = ssub.s32 128, 128
      %24 = vsyncadd [#allocation4], %s23
      %s25 = sshll.u32 [#allocation3], 4
      %s26 = int_to_ptr.vmem [resolvable:$true] %s25
      %31 = dma.hbm_to_vmem [thread:$0]  %s0, 128, %s26, [#allocation4], 64, 64, 4
    $region5: #{tpu_custom_call.1} parent=1 // pred_fallthru
      _
    // Predicated region
    $region6: #{tpu_custom_call.1} parent=1 // pred_check
      _
    $region7: #{tpu_custom_call.1} parent=1 // pred_check_branch
      %33 = sbr.rel (0) target = $region9
    $region8: #{tpu_custom_call.1} parent=1 // pred_region
      %s35 = ssub.s32 128, 128
      %36 = vsyncadd [#allocation7], %s35
      %s37 = sshll.u32 [#allocation6], 4
      %s38 = int_to_ptr.vmem [resolvable:$true] %s37
      %43 = dma.hbm_to_vmem [thread:$0]  %s1, 128, %s38, [#allocation7], 64, 64, 4
    $region9: #{tpu_custom_call.1} parent=1 // pred_fallthru
      _
    // Predicated region
    $region10: #{tpu_custom_call.1} parent=1 // pred_check
      _
    $region11: #{tpu_custom_call.1} parent=1 // pred_check_branch
      %45 = sbr.rel (0) target = $region13
    $region12: #{tpu_custom_call.1} parent=1 // pred_region
      %s47 = ssub.s32 128, 128
      %48 = vsyncadd [#allocation7], %s47
      %s49 = sshll.u32 [#allocation8], 4
      %s50 = int_to_ptr.vmem [resolvable:$true] %s49
      %55 = dma.hbm_to_vmem [thread:$0]  %s2, 128, %s50, [#allocation7], 64, 64, 4
    $region13: #{tpu_custom_call.1} parent=1 // pred_fallthru
      _
    // Predicated region
    $region14: #{tpu_custom_call.1} parent=1 // pred_check
      _
    $region15: #{tpu_custom_call.1} parent=1 // pred_check_branch
      %57 = sbr.rel (0) target = $region17
    $region16: #{tpu_custom_call.1} parent=1 // pred_region
      %s59 = ssub.s32 256, 256
      %60 = vsyncadd [#allocation10], %s59
      %s61 = sshll.u32 [#allocation9], 4
      %s62 = int_to_ptr.vmem [resolvable:$true] %s61
      %67 = dma.hbm_to_vmem [thread:$0]  %s3, 256, %s62, [#allocation10], 64, 64, 4
    $region17: #{tpu_custom_call.1} parent=1 // pred_fallthru
      _
    // Predicated region
    $region18: #{tpu_custom_call.1} parent=1 // pred_check
      _
    $region19: #{tpu_custom_call.1} parent=1 // pred_check_branch
      %69 = sbr.rel (0) target = $region21
    $region20: #{tpu_custom_call.1} parent=1 // pred_region
      %s71 = ssub.s32 256, 256
      %72 = vsyncadd [#allocation10], %s71
      %s73 = sshll.u32 [#allocation11], 4
      %s74 = int_to_ptr.vmem [resolvable:$true] %s73
      %79 = dma.hbm_to_vmem [thread:$0]  %s4, 256, %s74, [#allocation10], 64, 64, 4
    $region21: #{tpu_custom_call.1} parent=1 // pred_fallthru
      _
    // Predicated region
    $region22: #{tpu_custom_call.1} parent=1 // pred_check
      _
    $region23: #{tpu_custom_call.1} parent=1 // pred_check_branch
      %81 = sbr.rel (0) target = $region25
    $region24: #{tpu_custom_call.1} parent=1 // pred_region
      _
    $region25: #{tpu_custom_call.1} parent=1 // pred_fallthru
      _
    // Predicated region
    $region26: #{tpu_custom_call.1} parent=1 // pred_check
      _
    $region27: #{tpu_custom_call.1} parent=1 // pred_check_branch
      %83 = sbr.rel (0) target = $region29
    $region28: #{tpu_custom_call.1} parent=1 // pred_region
      %s85 = ssub.s32 256, 256
      %86 = vsyncadd [#allocation13], %s85
      %s87 = sshll.u32 [#allocation12], 4
      %s88 = int_to_ptr.vmem [resolvable:$true] %s87
      %93 = dma.hbm_to_vmem [thread:$0]  %s6, 256, %s88, [#allocation13], 64, 64, 4
    $region29: #{tpu_custom_call.1} parent=1 // pred_fallthru
      _
    // Predicated region
    $region30: #{tpu_custom_call.1} parent=1 // pred_check
      _
    $region31: #{tpu_custom_call.1} parent=1 // pred_check_branch
      %95 = sbr.rel (0) target = $region33
    $region32: #{tpu_custom_call.1} parent=1 // pred_region
      %96 = dma.done [#allocation4], 128
    $region33: #{tpu_custom_call.1} parent=1 // pred_fallthru
      _
    // Predicated region
    $region34: #{tpu_custom_call.1} parent=1 // pred_check
      _
    $region35: #{tpu_custom_call.1} parent=1 // pred_check_branch
      %98 = sbr.rel (0) target = $region37
    $region36: #{tpu_custom_call.1} parent=1 // pred_region
      %99 = dma.done [#allocation7], 128
    $region37: #{tpu_custom_call.1} parent=1 // pred_fallthru
      _
    // Predicated region
    $region38: #{tpu_custom_call.1} parent=1 // pred_check
      _
    $region39: #{tpu_custom_call.1} parent=1 // pred_check_branch
      %101 = sbr.rel (0) target = $region41
    $region40: #{tpu_custom_call.1} parent=1 // pred_region
      %102 = dma.done [#allocation7], 128
    $region41: #{tpu_custom_call.1} parent=1 // pred_fallthru
      _
    // Predicated region
    $region42: #{tpu_custom_call.1} parent=1 // pred_check
      _
    $region43: #{tpu_custom_call.1} parent=1 // pred_check_branch
      %104 = sbr.rel (0) target = $region45
    $region44: #{tpu_custom_call.1} parent=1 // pred_region
      %105 = dma.done [#allocation10], 256
    $region45: #{tpu_custom_call.1} parent=1 // pred_fallthru
      _
    // Predicated region
    $region46: #{tpu_custom_call.1} parent=1 // pred_check
      _
    $region47: #{tpu_custom_call.1} parent=1 // pred_check_branch
      %107 = sbr.rel (0) target = $region49
    $region48: #{tpu_custom_call.1} parent=1 // pred_region
      %108 = dma.done [#allocation10], 256
    $region49: #{tpu_custom_call.1} parent=1 // pred_fallthru
      _
    // Predicated region
    $region50: #{tpu_custom_call.1} parent=1 // pred_check
      _
    $region51: #{tpu_custom_call.1} parent=1 // pred_check_branch
      %110 = sbr.rel (0) target = $region53
    $region52: #{tpu_custom_call.1} parent=1 // pred_region
      %111 = dma.done [#allocation13], 256
    $region53: #{tpu_custom_call.1} parent=1 // pred_fallthru
      _
    %v113 = vld [vmem:[#allocation3] sm:$0xf]
    %v114 = vld [vmem:[#allocation3 + $0x4] sm:$0xf]
    %v115 = vld [vmem:[#allocation9] sm:$0xf]
    %v116 = vld [vmem:[#allocation9 + $0x4] sm:$0xf]
    %v117 = vld [vmem:[#allocation9 + $0x8] sm:$0xf]
    %v118 = vld [vmem:[#allocation9 + $0xc] sm:$0xf]
    %v121 = vunpack.c.l.b16 %v113
    %v122 = vunpack.c.l.b16 %v114
    %v123 = vpack.c.b16 %v122, %v121
    %v128 = vunpack.c.l.b16 %v115
    %v129 = vunpack.c.l.b16 %v116
    %v130 = vunpack.c.l.b16 %v117
    %v131 = vunpack.c.l.b16 %v118
    %v132 = vpack.c.b16 %v129, %v128
    %v133 = vpack.c.b16 %v131, %v130
    %vm136 = vcmask 261120
    %v138 = vsel %vm136, %v123, 0
    %140 = vmatprep.subr.bf16.mxu0 0
    %141 = vmatpush1.bf16.msra.mxu0 %v132
    %142 = vmatprep.subr.bf16.mxu0 0
    %143 = vmatpush1.bf16.msra.mxu0 %v133
    %144 = vmatprep.subr.bf16.mxu0 0
    %145 = vmatpush1.bf16.msra.mxu0 0
    %146 = vmatprep.subr.bf16.mxu0 0
    %147 = vmatpush1.bf16.msra.mxu0 0
    %148 = vmatprep.subr.bf16.mxu0 0
    %149 = vmatpush1.bf16.msra.mxu0 0
    %150 = vmatprep.subr.bf16.mxu0 0
    %151 = vmatpush1.bf16.msra.mxu0 0
    %152 = vmatprep.subr.bf16.mxu0 0
    %153 = vmatpush1.bf16.msra.mxu0 0
    %154 = vmatprep.subr.bf16.mxu0 0
    %155 = vmatpush1.bf16.msra.mxu0 0
    %156 = vmatprep.subr.bf16.mxu0 0
    %157 = vmatpush1.bf16.msra.mxu0 0
    %158 = vmatprep.subr.bf16.mxu0 0
    %159 = vmatpush1.bf16.msra.mxu0 0
    %160 = vmatprep.subr.bf16.mxu0 0
    %161 = vmatpush1.bf16.msra.mxu0 0
    %162 = vmatprep.subr.bf16.mxu0 0
    %163 = vmatpush1.bf16.msra.mxu0 0
    %164 = vmatprep.subr.bf16.mxu0 0
    %165 = vmatpush1.bf16.msra.mxu0 0
    %166 = vmatprep.subr.bf16.mxu0 0
    %167 = vmatpush1.bf16.msra.mxu0 0
    %168 = vmatprep.subr.bf16.mxu0 0
    %169 = vmatpush1.bf16.msra.mxu0 0
    %170 = vmatprep.subr.bf16.mxu0 0
    %171 = vmatpush1.bf16.msra.mxu0 0
    %172 = vmatprep.mubr.bf16.mxu0 0
    %173 = vmatmul.mubr.bf16.gmra.mrb[0].mxu0 %v138
    %v174 = vpop.f32.mrb[0].mxu0
    %v175 = vadd.f32 0.0, %v174
    %v176 = vpop.f32.mrb[0].mxu0
    %v177 = vpop.f32.mrb[0].mxu0
    %v178 = vadd.f32 0.0, %v177
    %v179 = vpop.f32.mrb[0].mxu0
    %180 = vdwg.mxu0
    %v181 = vld [vmem:[#allocation6] sm:$0xf]
    %v182 = vld [vmem:[#allocation6 + $0x4] sm:$0xf]
    %v183 = vld [vmem:[#allocation11] sm:$0xf]
    %v184 = vld [vmem:[#allocation11 + $0x4] sm:$0xf]
    %v185 = vld [vmem:[#allocation11 + $0x8] sm:$0xf]
    %v186 = vld [vmem:[#allocation11 + $0xc] sm:$0xf]
    %v189 = vunpack.c.l.b16 %v181
    %v190 = vunpack.c.l.b16 %v182
    %v191 = vpack.c.b16 %v190, %v189
    %v196 = vunpack.c.l.b16 %v183
    %v197 = vunpack.c.l.b16 %v184
    %v198 = vunpack.c.l.b16 %v185
    %v199 = vunpack.c.l.b16 %v186
    %v200 = vpack.c.b16 %v197, %v196
    %v201 = vpack.c.b16 %v199, %v198
    %v205 = vsel %vm136, %v191, 0
    %207 = vmatprep.subr.bf16.mxu0 0
    %208 = vmatpush1.bf16.msra.mxu0 %v200
    %209 = vmatprep.subr.bf16.mxu0 0
    %210 = vmatpush1.bf16.msra.mxu0 %v201
    %211 = vmatprep.subr.bf16.mxu0 0
    %212 = vmatpush1.bf16.msra.mxu0 0
    %213 = vmatprep.subr.bf16.mxu0 0
    %214 = vmatpush1.bf16.msra.mxu0 0
    %215 = vmatprep.subr.bf16.mxu0 0
    %216 = vmatpush1.bf16.msra.mxu0 0
    %217 = vmatprep.subr.bf16.mxu0 0
    %218 = vmatpush1.bf16.msra.mxu0 0
    %219 = vmatprep.subr.bf16.mxu0 0
    %220 = vmatpush1.bf16.msra.mxu0 0
    %221 = vmatprep.subr.bf16.mxu0 0
    %222 = vmatpush1.bf16.msra.mxu0 0
    %223 = vmatprep.subr.bf16.mxu0 0
    %224 = vmatpush1.bf16.msra.mxu0 0
    %225 = vmatprep.subr.bf16.mxu0 0
    %226 = vmatpush1.bf16.msra.mxu0 0
    %227 = vmatprep.subr.bf16.mxu0 0
    %228 = vmatpush1.bf16.msra.mxu0 0
    %229 = vmatprep.subr.bf16.mxu0 0
    %230 = vmatpush1.bf16.msra.mxu0 0
    %231 = vmatprep.subr.bf16.mxu0 0
    %232 = vmatpush1.bf16.msra.mxu0 0
    %233 = vmatprep.subr.bf16.mxu0 0
    %234 = vmatpush1.bf16.msra.mxu0 0
    %235 = vmatprep.subr.bf16.mxu0 0
    %236 = vmatpush1.bf16.msra.mxu0 0
    %237 = vmatprep.subr.bf16.mxu0 0
    %238 = vmatpush1.bf16.msra.mxu0 0
    %239 = vmatprep.mubr.bf16.mxu0 0
    %240 = vmatmul.mubr.bf16.gmra.mrb[0].mxu0 %v205
    %v241 = vpop.f32.mrb[0].mxu0
    %v242 = vadd.f32 0.0, %v241
    %v243 = vpop.f32.mrb[0].mxu0
    %v244 = vpop.f32.mrb[0].mxu0
    %v245 = vadd.f32 0.0, %v244
    %v246 = vpop.f32.mrb[0].mxu0
    %247 = vdwg.mxu0
    %v248 = vld [vmem:[#allocation8] sm:$0xf]
    %v249 = vld [vmem:[#allocation8 + $0x4] sm:$0xf]
    %v250 = vld [vmem:[%s5] sm:$0xf]
    %v251 = vld [vmem:[%s5 + $0x4] sm:$0xf]
    %v252 = vld [vmem:[%s5 + $0x8] sm:$0xf]
    %v253 = vld [vmem:[%s5 + $0xc] sm:$0xf]
    %v256 = vunpack.c.l.b16 %v248
    %v257 = vunpack.c.l.b16 %v249
    %v258 = vpack.c.b16 %v257, %v256
    %v263 = vunpack.c.l.b16 %v250
    %v264 = vunpack.c.l.b16 %v251
    %v265 = vunpack.c.l.b16 %v252
    %v266 = vunpack.c.l.b16 %v253
    %v267 = vpack.c.b16 %v264, %v263
    %v268 = vpack.c.b16 %v266, %v265
    %v272 = vsel %vm136, %v258, 0
    %274 = vmatprep.subr.bf16.mxu0 0
    %275 = vmatpush1.bf16.msra.mxu0 %v267
    %276 = vmatprep.subr.bf16.mxu0 0
    %277 = vmatpush1.bf16.msra.mxu0 %v268
    %278 = vmatprep.subr.bf16.mxu0 0
    %279 = vmatpush1.bf16.msra.mxu0 0
    %280 = vmatprep.subr.bf16.mxu0 0
    %281 = vmatpush1.bf16.msra.mxu0 0
    %282 = vmatprep.subr.bf16.mxu0 0
    %283 = vmatpush1.bf16.msra.mxu0 0
    %284 = vmatprep.subr.bf16.mxu0 0
    %285 = vmatpush1.bf16.msra.mxu0 0
    %286 = vmatprep.subr.bf16.mxu0 0
    %287 = vmatpush1.bf16.msra.mxu0 0
    %288 = vmatprep.subr.bf16.mxu0 0
    %289 = vmatpush1.bf16.msra.mxu0 0
    %290 = vmatprep.subr.bf16.mxu0 0
    %291 = vmatpush1.bf16.msra.mxu0 0
    %292 = vmatprep.subr.bf16.mxu0 0
    %293 = vmatpush1.bf16.msra.mxu0 0
    %294 = vmatprep.subr.bf16.mxu0 0
    %295 = vmatpush1.bf16.msra.mxu0 0
    %296 = vmatprep.subr.bf16.mxu0 0
    %297 = vmatpush1.bf16.msra.mxu0 0
    %298 = vmatprep.subr.bf16.mxu0 0
    %299 = vmatpush1.bf16.msra.mxu0 0
    %300 = vmatprep.subr.bf16.mxu0 0
    %301 = vmatpush1.bf16.msra.mxu0 0
    %302 = vmatprep.subr.bf16.mxu0 0
    %303 = vmatpush1.bf16.msra.mxu0 0
    %304 = vmatprep.subr.bf16.mxu0 0
    %305 = vmatpush1.bf16.msra.mxu0 0
    %306 = vmatprep.mubr.bf16.mxu0 0
    %307 = vmatmul.mubr.bf16.gmra.mrb[0].mxu0 %v272
    %v308 = vpop.f32.mrb[0].mxu0
    %v309 = vadd.f32 0.0, %v308
    %v310 = vpop.f32.mrb[0].mxu0
    %v311 = vpop.f32.mrb[0].mxu0
    %v312 = vadd.f32 0.0, %v311
    %v313 = vpop.f32.mrb[0].mxu0
    %314 = vdwg.mxu0
    %v315 = vpack.c.bf16 %v178, %v175
    %v316 = vpack.c.bf16 %v245, %v242
    %v317 = vpack.c.bf16 %v312, %v309
    %vm318 = vcmask 64512
    %v320 = vsel %vm318, %v315, 0
    %v323 = vsel %vm318, %v316, 0
    %325 = vmatprep.subr.bf16.mxu0 0
    %326 = vmatpush1.bf16.xpose.msra.mxu0 %v323
    %327 = vmatprep.subr.bf16.mxu0 0
    %328 = vmatpush1.bf16.xpose.msra.mxu0 0
    %329 = vmatprep.subr.bf16.mxu0 0
    %330 = vmatpush1.bf16.xpose.msra.mxu0 0
    %331 = vmatprep.subr.bf16.mxu0 0
    %332 = vmatpush1.bf16.xpose.msra.mxu0 0
    %333 = vmatprep.subr.bf16.mxu0 0
    %334 = vmatpush1.bf16.xpose.msra.mxu0 0
    %335 = vmatprep.subr.bf16.mxu0 0
    %336 = vmatpush1.bf16.xpose.msra.mxu0 0
    %337 = vmatprep.subr.bf16.mxu0 0
    %338 = vmatpush1.bf16.xpose.msra.mxu0 0
    %339 = vmatprep.subr.bf16.mxu0 0
    %340 = vmatpush1.bf16.xpose.msra.mxu0 0
    %341 = vmatprep.subr.bf16.mxu0 0
    %342 = vmatpush1.bf16.xpose.msra.mxu0 0
    %343 = vmatprep.subr.bf16.mxu0 0
    %344 = vmatpush1.bf16.xpose.msra.mxu0 0
    %345 = vmatprep.subr.bf16.mxu0 0
    %346 = vmatpush1.bf16.xpose.msra.mxu0 0
    %347 = vmatprep.subr.bf16.mxu0 0
    %348 = vmatpush1.bf16.xpose.msra.mxu0 0
    %349 = vmatprep.subr.bf16.mxu0 0
    %350 = vmatpush1.bf16.xpose.msra.mxu0 0
    %351 = vmatprep.subr.bf16.mxu0 0
    %352 = vmatpush1.bf16.xpose.msra.mxu0 0
    %353 = vmatprep.subr.bf16.mxu0 0
    %354 = vmatpush1.bf16.xpose.msra.mxu0 0
    %355 = vmatprep.subr.bf16.mxu0 0
    %356 = vmatpush1.bf16.xpose.msra.mxu0 0
    %357 = vmatprep.mubr.bf16.mxu0 0
    %358 = vmatmul.mubr.bf16.gmra.mrb[0].mxu0 %v320
    %v359 = vpop.f32.mrb[0].mxu0
    %v360 = vadd.f32 0.0, %v359
    %v361 = vpop.f32.mrb[0].mxu0
    %v362 = vpop.f32.mrb[0].mxu0
    %v363 = vpop.f32.mrb[0].mxu0
    %364 = vdwg.mxu0
    %v365 = vsel %vm318, %v360, -inf
    %366 = vmax.xlane.f32.xlu0 %v365
    %v367 = vpop.xlane.xlu0 %366
    %v368 = vsub.f32 %v360, %v367
    %v369 = vmul.f32 %v368, 1.442695
    %v370 = vpow.pop %v369
    %v371 = vsel %vm318, %v370, 0.0
    %372 = vadd.xlane.f32.xlu0 %v371
    %v373 = vpop.xlane.xlu0 %372
    %v374 = vrcp.pop %v373
    %v375 = vmul.f32 %v370, %v374
    %376 = vst.msk [vmem:[#allocation15] sm:$0xff] %vm318, %v375
    %v377 = vpack.c.bf16 %v375, %v375
    %v379 = vsel %vm318, %v377, 0
    %vm381 = vcmask 1043456
    %v383 = vsel %vm381, %v317, 0
    %385 = vmatprep.subr.bf16.mxu0 0
    %386 = vmatpush1.bf16.msra.mxu0 %v383
    %387 = vmatprep.subr.bf16.mxu0 0
    %388 = vmatpush1.bf16.msra.mxu0 0
    %389 = vmatprep.subr.bf16.mxu0 0
    %390 = vmatpush1.bf16.msra.mxu0 0
    %391 = vmatprep.subr.bf16.mxu0 0
    %392 = vmatpush1.bf16.msra.mxu0 0
    %393 = vmatprep.subr.bf16.mxu0 0
    %394 = vmatpush1.bf16.msra.mxu0 0
    %395 = vmatprep.subr.bf16.mxu0 0
    %396 = vmatpush1.bf16.msra.mxu0 0
    %397 = vmatprep.subr.bf16.mxu0 0
    %398 = vmatpush1.bf16.msra.mxu0 0
    %399 = vmatprep.subr.bf16.mxu0 0
    %400 = vmatpush1.bf16.msra.mxu0 0
    %401 = vmatprep.subr.bf16.mxu0 0
    %402 = vmatpush1.bf16.msra.mxu0 0
    %403 = vmatprep.subr.bf16.mxu0 0
    %404 = vmatpush1.bf16.msra.mxu0 0
    %405 = vmatprep.subr.bf16.mxu0 0
    %406 = vmatpush1.bf16.msra.mxu0 0
    %407 = vmatprep.subr.bf16.mxu0 0
    %408 = vmatpush1.bf16.msra.mxu0 0
    %409 = vmatprep.subr.bf16.mxu0 0
    %410 = vmatpush1.bf16.msra.mxu0 0
    %411 = vmatprep.subr.bf16.mxu0 0
    %412 = vmatpush1.bf16.msra.mxu0 0
    %413 = vmatprep.subr.bf16.mxu0 0
    %414 = vmatpush1.bf16.msra.mxu0 0
    %415 = vmatprep.subr.bf16.mxu0 0
    %416 = vmatpush1.bf16.msra.mxu0 0
    %417 = vmatprep.mubr.bf16.mxu0 0
    %418 = vmatmul.mubr.bf16.gmra.mrb[0].mxu0 %v379
    %v419 = vpop.f32.mrb[0].mxu0
    %v420 = vadd.f32 0.0, %v419
    %v421 = vpop.f32.mrb[0].mxu0
    %v422 = vpop.f32.mrb[0].mxu0
    %v423 = vpop.f32.mrb[0].mxu0
    %424 = vdwg.mxu0
    %425 = vst.msk [vmem:[#allocation2] sm:$0xff] %vm318, %v420
    %427 = vrot.lane.b32.xlu0 %v315, 120
    %v428 = vpop.permute.xlu0 %427
    %430 = vrot.lane.b32.xlu0 %v316, 120
    %v431 = vpop.permute.xlu0 %430
    %v433 = vsel %vm318, %v428, 0
    %v436 = vsel %vm318, %v431, 0
    %438 = vmatprep.subr.bf16.mxu0 0
    %439 = vmatpush1.bf16.xpose.msra.mxu0 %v436
    %440 = vmatprep.subr.bf16.mxu0 0
    %441 = vmatpush1.bf16.xpose.msra.mxu0 0
    %442 = vmatprep.subr.bf16.mxu0 0
    %443 = vmatpush1.bf16.xpose.msra.mxu0 0
    %444 = vmatprep.subr.bf16.mxu0 0
    %445 = vmatpush1.bf16.xpose.msra.mxu0 0
    %446 = vmatprep.subr.bf16.mxu0 0
    %447 = vmatpush1.bf16.xpose.msra.mxu0 0
    %448 = vmatprep.subr.bf16.mxu0 0
    %449 = vmatpush1.bf16.xpose.msra.mxu0 0
    %450 = vmatprep.subr.bf16.mxu0 0
    %451 = vmatpush1.bf16.xpose.msra.mxu0 0
    %452 = vmatprep.subr.bf16.mxu0 0
    %453 = vmatpush1.bf16.xpose.msra.mxu0 0
    %454 = vmatprep.subr.bf16.mxu0 0
    %455 = vmatpush1.bf16.xpose.msra.mxu0 0
    %456 = vmatprep.subr.bf16.mxu0 0
    %457 = vmatpush1.bf16.xpose.msra.mxu0 0
    %458 = vmatprep.subr.bf16.mxu0 0
    %459 = vmatpush1.bf16.xpose.msra.mxu0 0
    %460 = vmatprep.subr.bf16.mxu0 0
    %461 = vmatpush1.bf16.xpose.msra.mxu0 0
    %462 = vmatprep.subr.bf16.mxu0 0
    %463 = vmatpush1.bf16.xpose.msra.mxu0 0
    %464 = vmatprep.subr.bf16.mxu0 0
    %465 = vmatpush1.bf16.xpose.msra.mxu0 0
    %466 = vmatprep.subr.bf16.mxu0 0
    %467 = vmatpush1.bf16.xpose.msra.mxu0 0
    %468 = vmatprep.subr.bf16.mxu0 0
    %469 = vmatpush1.bf16.xpose.msra.mxu0 0
    %470 = vmatprep.mubr.bf16.mxu0 0
    %471 = vmatmul.mubr.bf16.gmra.mrb[0].mxu0 %v433
    %v472 = vpop.f32.mrb[0].mxu0
    %v473 = vadd.f32 0.0, %v472
    %v474 = vpop.f32.mrb[0].mxu0
    %v475 = vpop.f32.mrb[0].mxu0
    %v476 = vpop.f32.mrb[0].mxu0
    %477 = vdwg.mxu0
    %v478 = vsel %vm318, %v473, -inf
    %479 = vmax.xlane.f32.xlu0 %v478
    %v480 = vpop.xlane.xlu0 %479
    %v481 = vsub.f32 %v473, %v480
    %v482 = vmul.f32 %v481, 1.442695
    %v483 = vpow.pop %v482
    %v484 = vsel %vm318, %v483, 0.0
    %485 = vadd.xlane.f32.xlu0 %v484
    %v486 = vpop.xlane.xlu0 %485
    %v487 = vrcp.pop %v486
    %v488 = vmul.f32 %v483, %v487
    %s489 = scalar_lea.vmem [#allocation15], 8
    %490 = vst.msk [vmem:[%s489] sm:$0xff] %vm318, %v488
    %v491 = vpack.c.bf16 %v488, %v488
    %493 = vrot.lane.b32.xlu0 %v317, 120
    %v494 = vpop.permute.xlu0 %493
    %v496 = vsel %vm318, %v491, 0
    %v499 = vsel %vm381, %v494, 0
    %501 = vmatprep.subr.bf16.mxu0 0
    %502 = vmatpush1.bf16.msra.mxu0 %v499
    %503 = vmatprep.subr.bf16.mxu0 0
    %504 = vmatpush1.bf16.msra.mxu0 0
    %505 = vmatprep.subr.bf16.mxu0 0
    %506 = vmatpush1.bf16.msra.mxu0 0
    %507 = vmatprep.subr.bf16.mxu0 0
    %508 = vmatpush1.bf16.msra.mxu0 0
    %509 = vmatprep.subr.bf16.mxu0 0
    %510 = vmatpush1.bf16.msra.mxu0 0
    %511 = vmatprep.subr.bf16.mxu0 0
    %512 = vmatpush1.bf16.msra.mxu0 0
    %513 = vmatprep.subr.bf16.mxu0 0
    %514 = vmatpush1.bf16.msra.mxu0 0
    %515 = vmatprep.subr.bf16.mxu0 0
    %516 = vmatpush1.bf16.msra.mxu0 0
    %517 = vmatprep.subr.bf16.mxu0 0
    %518 = vmatpush1.bf16.msra.mxu0 0
    %519 = vmatprep.subr.bf16.mxu0 0
    %520 = vmatpush1.bf16.msra.mxu0 0
    %521 = vmatprep.subr.bf16.mxu0 0
    %522 = vmatpush1.bf16.msra.mxu0 0
    %523 = vmatprep.subr.bf16.mxu0 0
    %524 = vmatpush1.bf16.msra.mxu0 0
    %525 = vmatprep.subr.bf16.mxu0 0
    %526 = vmatpush1.bf16.msra.mxu0 0
    %527 = vmatprep.subr.bf16.mxu0 0
    %528 = vmatpush1.bf16.msra.mxu0 0
    %529 = vmatprep.subr.bf16.mxu0 0
    %530 = vmatpush1.bf16.msra.mxu0 0
    %531 = vmatprep.subr.bf16.mxu0 0
    %532 = vmatpush1.bf16.msra.mxu0 0
    %533 = vmatprep.mubr.bf16.mxu0 0
    %534 = vmatmul.mubr.bf16.gmra.mrb[0].mxu0 %v496
    %v535 = vpop.f32.mrb[0].mxu0
    %v536 = vadd.f32 0.0, %v535
    %v537 = vpop.f32.mrb[0].mxu0
    %v538 = vpop.f32.mrb[0].mxu0
    %v539 = vpop.f32.mrb[0].mxu0
    %540 = vdwg.mxu0
    %542 = vrot.lane.b32.xlu0 %v536, 8
    %v543 = vpop.permute.xlu0 %542
    %vm545 = vcmask 130112
    %546 = vst.msk [vmem:[#allocation2] sm:$0xff] %vm545, %v543
    %547 = vrot.lane.b32.xlu0 %v315, 112
    %v548 = vpop.permute.xlu0 %547
    %549 = vrot.lane.b32.xlu0 %v316, 112
    %v550 = vpop.permute.xlu0 %549
    %v552 = vsel %vm318, %v548, 0
    %v555 = vsel %vm318, %v550, 0
    %557 = vmatprep.subr.bf16.mxu0 0
    %558 = vmatpush1.bf16.xpose.msra.mxu0 %v555
    %559 = vmatprep.subr.bf16.mxu0 0
    %560 = vmatpush1.bf16.xpose.msra.mxu0 0
    %561 = vmatprep.subr.bf16.mxu0 0
    %562 = vmatpush1.bf16.xpose.msra.mxu0 0
    %563 = vmatprep.subr.bf16.mxu0 0
    %564 = vmatpush1.bf16.xpose.msra.mxu0 0
    %565 = vmatprep.subr.bf16.mxu0 0
    %566 = vmatpush1.bf16.xpose.msra.mxu0 0
    %567 = vmatprep.subr.bf16.mxu0 0
    %568 = vmatpush1.bf16.xpose.msra.mxu0 0
    %569 = vmatprep.subr.bf16.mxu0 0
    %570 = vmatpush1.bf16.xpose.msra.mxu0 0
    %571 = vmatprep.subr.bf16.mxu0 0
    %572 = vmatpush1.bf16.xpose.msra.mxu0 0
    %573 = vmatprep.subr.bf16.mxu0 0
    %574 = vmatpush1.bf16.xpose.msra.mxu0 0
    %575 = vmatprep.subr.bf16.mxu0 0
    %576 = vmatpush1.bf16.xpose.msra.mxu0 0
    %577 = vmatprep.subr.bf16.mxu0 0
    %578 = vmatpush1.bf16.xpose.msra.mxu0 0
    %579 = vmatprep.subr.bf16.mxu0 0
    %580 = vmatpush1.bf16.xpose.msra.mxu0 0
    %581 = vmatprep.subr.bf16.mxu0 0
    %582 = vmatpush1.bf16.xpose.msra.mxu0 0
    %583 = vmatprep.subr.bf16.mxu0 0
    %584 = vmatpush1.bf16.xpose.msra.mxu0 0
    %585 = vmatprep.subr.bf16.mxu0 0
    %586 = vmatpush1.bf16.xpose.msra.mxu0 0
    %587 = vmatprep.subr.bf16.mxu0 0
    %588 = vmatpush1.bf16.xpose.msra.mxu0 0
    %589 = vmatprep.mubr.bf16.mxu0 0
    %590 = vmatmul.mubr.bf16.gmra.mrb[0].mxu0 %v552
    %v591 = vpop.f32.mrb[0].mxu0
    %v592 = vadd.f32 0.0, %v591
    %v593 = vpop.f32.mrb[0].mxu0
    %v594 = vpop.f32.mrb[0].mxu0
    %v595 = vpop.f32.mrb[0].mxu0
    %596 = vdwg.mxu0
    %v597 = vsel %vm318, %v592, -inf
    %598 = vmax.xlane.f32.xlu0 %v597
    %v599 = vpop.xlane.xlu0 %598
    %v600 = vsub.f32 %v592, %v599
    %v601 = vmul.f32 %v600, 1.442695
    %v602 = vpow.pop %v601
    %v603 = vsel %vm318, %v602, 0.0
    %604 = vadd.xlane.f32.xlu0 %v603
    %v605 = vpop.xlane.xlu0 %604
    %v606 = vrcp.pop %v605
    %v607 = vmul.f32 %v602, %v606
    %s608 = scalar_lea.vmem [#allocation15], 16
    %609 = vst.msk [vmem:[%s608] sm:$0xff] %vm318, %v607
    %v610 = vpack.c.bf16 %v607, %v607
    %611 = vrot.lane.b32.xlu0 %v317, 112
    %v612 = vpop.permute.xlu0 %611
    %v614 = vsel %vm318, %v610, 0
    %v617 = vsel %vm381, %v612, 0
    %619 = vmatprep.subr.bf16.mxu0 0
    %620 = vmatpush1.bf16.msra.mxu0 %v617
    %621 = vmatprep.subr.bf16.mxu0 0
    %622 = vmatpush1.bf16.msra.mxu0 0
    %623 = vmatprep.subr.bf16.mxu0 0
    %624 = vmatpush1.bf16.msra.mxu0 0
    %625 = vmatprep.subr.bf16.mxu0 0
    %626 = vmatpush1.bf16.msra.mxu0 0
    %627 = vmatprep.subr.bf16.mxu0 0
    %628 = vmatpush1.bf16.msra.mxu0 0
    %629 = vmatprep.subr.bf16.mxu0 0
    %630 = vmatpush1.bf16.msra.mxu0 0
    %631 = vmatprep.subr.bf16.mxu0 0
    %632 = vmatpush1.bf16.msra.mxu0 0
    %633 = vmatprep.subr.bf16.mxu0 0
    %634 = vmatpush1.bf16.msra.mxu0 0
    %635 = vmatprep.subr.bf16.mxu0 0
    %636 = vmatpush1.bf16.msra.mxu0 0
    %637 = vmatprep.subr.bf16.mxu0 0
    %638 = vmatpush1.bf16.msra.mxu0 0
    %639 = vmatprep.subr.bf16.mxu0 0
    %640 = vmatpush1.bf16.msra.mxu0 0
    %641 = vmatprep.subr.bf16.mxu0 0
    %642 = vmatpush1.bf16.msra.mxu0 0
    %643 = vmatprep.subr.bf16.mxu0 0
    %644 = vmatpush1.bf16.msra.mxu0 0
    %645 = vmatprep.subr.bf16.mxu0 0
    %646 = vmatpush1.bf16.msra.mxu0 0
    %647 = vmatprep.subr.bf16.mxu0 0
    %648 = vmatpush1.bf16.msra.mxu0 0
    %649 = vmatprep.subr.bf16.mxu0 0
    %650 = vmatpush1.bf16.msra.mxu0 0
    %651 = vmatprep.mubr.bf16.mxu0 0
    %652 = vmatmul.mubr.bf16.gmra.mrb[0].mxu0 %v614
    %v653 = vpop.f32.mrb[0].mxu0
    %v654 = vadd.f32 0.0, %v653
    %v655 = vpop.f32.mrb[0].mxu0
    %v656 = vpop.f32.mrb[0].mxu0
    %v657 = vpop.f32.mrb[0].mxu0
    %658 = vdwg.mxu0
    %660 = vrot.lane.b32.xlu0 %v654, 16
    %v661 = vpop.permute.xlu0 %660
    %vm663 = vcmask 195712
    %664 = vst.msk [vmem:[#allocation2] sm:$0xff] %vm663, %v661
    %665 = vrot.lane.b32.xlu0 %v315, 104
    %v666 = vpop.permute.xlu0 %665
    %667 = vrot.lane.b32.xlu0 %v316, 104
    %v668 = vpop.permute.xlu0 %667
    %v670 = vsel %vm318, %v666, 0
    %v673 = vsel %vm318, %v668, 0
    %675 = vmatprep.subr.bf16.mxu0 0
    %676 = vmatpush1.bf16.xpose.msra.mxu0 %v673
    %677 = vmatprep.subr.bf16.mxu0 0
    %678 = vmatpush1.bf16.xpose.msra.mxu0 0
    %679 = vmatprep.subr.bf16.mxu0 0
    %680 = vmatpush1.bf16.xpose.msra.mxu0 0
    %681 = vmatprep.subr.bf16.mxu0 0
    %682 = vmatpush1.bf16.xpose.msra.mxu0 0
    %683 = vmatprep.subr.bf16.mxu0 0
    %684 = vmatpush1.bf16.xpose.msra.mxu0 0
    %685 = vmatprep.subr.bf16.mxu0 0
    %686 = vmatpush1.bf16.xpose.msra.mxu0 0
    %687 = vmatprep.subr.bf16.mxu0 0
    %688 = vmatpush1.bf16.xpose.msra.mxu0 0
    %689 = vmatprep.subr.bf16.mxu0 0
    %690 = vmatpush1.bf16.xpose.msra.mxu0 0
    %691 = vmatprep.subr.bf16.mxu0 0
    %692 = vmatpush1.bf16.xpose.msra.mxu0 0
    %693 = vmatprep.subr.bf16.mxu0 0
    %694 = vmatpush1.bf16.xpose.msra.mxu0 0
    %695 = vmatprep.subr.bf16.mxu0 0
    %696 = vmatpush1.bf16.xpose.msra.mxu0 0
    %697 = vmatprep.subr.bf16.mxu0 0
    %698 = vmatpush1.bf16.xpose.msra.mxu0 0
    %699 = vmatprep.subr.bf16.mxu0 0
    %700 = vmatpush1.bf16.xpose.msra.mxu0 0
    %701 = vmatprep.subr.bf16.mxu0 0
    %702 = vmatpush1.bf16.xpose.msra.mxu0 0
    %703 = vmatprep.subr.bf16.mxu0 0
    %704 = vmatpush1.bf16.xpose.msra.mxu0 0
    %705 = vmatprep.subr.bf16.mxu0 0
    %706 = vmatpush1.bf16.xpose.msra.mxu0 0
    %707 = vmatprep.mubr.bf16.mxu0 0
    %708 = vmatmul.mubr.bf16.gmra.mrb[0].mxu0 %v670
    %v709 = vpop.f32.mrb[0].mxu0
    %v710 = vadd.f32 0.0, %v709
    %v711 = vpop.f32.mrb[0].mxu0
    %v712 = vpop.f32.mrb[0].mxu0
    %v713 = vpop.f32.mrb[0].mxu0
    %714 = vdwg.mxu0
    %v715 = vsel %vm318, %v710, -inf
    %716 = vmax.xlane.f32.xlu0 %v715
    %v717 = vpop.xlane.xlu0 %716
    %v718 = vsub.f32 %v710, %v717
    %v719 = vmul.f32 %v718, 1.442695
    %v720 = vpow.pop %v719
    %v721 = vsel %vm318, %v720, 0.0
    %722 = vadd.xlane.f32.xlu0 %v721
    %v723 = vpop.xlane.xlu0 %722
    %v724 = vrcp.pop %v723
    %v725 = vmul.f32 %v720, %v724
    %s726 = scalar_lea.vmem [#allocation15], 24
    %727 = vst.msk [vmem:[%s726] sm:$0xff] %vm318, %v725
    %v728 = vpack.c.bf16 %v725, %v725
    %729 = vrot.lane.b32.xlu0 %v317, 104
    %v730 = vpop.permute.xlu0 %729
    %v732 = vsel %vm318, %v728, 0
    %v735 = vsel %vm381, %v730, 0
    %737 = vmatprep.subr.bf16.mxu0 0
    %738 = vmatpush1.bf16.msra.mxu0 %v735
    %739 = vmatprep.subr.bf16.mxu0 0
    %740 = vmatpush1.bf16.msra.mxu0 0
    %741 = vmatprep.subr.bf16.mxu0 0
    %742 = vmatpush1.bf16.msra.mxu0 0
    %743 = vmatprep.subr.bf16.mxu0 0
    %744 = vmatpush1.bf16.msra.mxu0 0
    %745 = vmatprep.subr.bf16.mxu0 0
    %746 = vmatpush1.bf16.msra.mxu0 0
    %747 = vmatprep.subr.bf16.mxu0 0
    %748 = vmatpush1.bf16.msra.mxu0 0
    %749 = vmatprep.subr.bf16.mxu0 0
    %750 = vmatpush1.bf16.msra.mxu0 0
    %751 = vmatprep.subr.bf16.mxu0 0
    %752 = vmatpush1.bf16.msra.mxu0 0
    %753 = vmatprep.subr.bf16.mxu0 0
    %754 = vmatpush1.bf16.msra.mxu0 0
    %755 = vmatprep.subr.bf16.mxu0 0
    %756 = vmatpush1.bf16.msra.mxu0 0
    %757 = vmatprep.subr.bf16.mxu0 0
    %758 = vmatpush1.bf16.msra.mxu0 0
    %759 = vmatprep.subr.bf16.mxu0 0
    %760 = vmatpush1.bf16.msra.mxu0 0
    %761 = vmatprep.subr.bf16.mxu0 0
    %762 = vmatpush1.bf16.msra.mxu0 0
    %763 = vmatprep.subr.bf16.mxu0 0
    %764 = vmatpush1.bf16.msra.mxu0 0
    %765 = vmatprep.subr.bf16.mxu0 0
    %766 = vmatpush1.bf16.msra.mxu0 0
    %767 = vmatprep.subr.bf16.mxu0 0
    %768 = vmatpush1.bf16.msra.mxu0 0
    %769 = vmatprep.mubr.bf16.mxu0 0
    %770 = vmatmul.mubr.bf16.gmra.mrb[0].mxu0 %v732
    %v771 = vpop.f32.mrb[0].mxu0
    %v772 = vadd.f32 0.0, %v771
    %v773 = vpop.f32.mrb[0].mxu0
    %v774 = vpop.f32.mrb[0].mxu0
    %v775 = vpop.f32.mrb[0].mxu0
    %776 = vdwg.mxu0
    %778 = vrot.lane.b32.xlu0 %v772, 24
    %v779 = vpop.permute.xlu0 %778
    %vm781 = vcmask 261312
    %782 = vst.msk [vmem:[#allocation2] sm:$0xff] %vm781, %v779
    %v783 = vrot.slane %v315, 4
    %v784 = vrot.slane %v316, 4
    %v786 = vsel %vm318, %v783, 0
    %v789 = vsel %vm318, %v784, 0
    %791 = vmatprep.subr.bf16.mxu0 0
    %792 = vmatpush1.bf16.xpose.msra.mxu0 %v789
    %793 = vmatprep.subr.bf16.mxu0 0
    %794 = vmatpush1.bf16.xpose.msra.mxu0 0
    %795 = vmatprep.subr.bf16.mxu0 0
    %796 = vmatpush1.bf16.xpose.msra.mxu0 0
    %797 = vmatprep.subr.bf16.mxu0 0
    %798 = vmatpush1.bf16.xpose.msra.mxu0 0
    %799 = vmatprep.subr.bf16.mxu0 0
    %800 = vmatpush1.bf16.xpose.msra.mxu0 0
    %801 = vmatprep.subr.bf16.mxu0 0
    %802 = vmatpush1.bf16.xpose.msra.mxu0 0
    %803 = vmatprep.subr.bf16.mxu0 0
    %804 = vmatpush1.bf16.xpose.msra.mxu0 0
    %805 = vmatprep.subr.bf16.mxu0 0
    %806 = vmatpush1.bf16.xpose.msra.mxu0 0
    %807 = vmatprep.subr.bf16.mxu0 0
    %808 = vmatpush1.bf16.xpose.msra.mxu0 0
    %809 = vmatprep.subr.bf16.mxu0 0
    %810 = vmatpush1.bf16.xpose.msra.mxu0 0
    %811 = vmatprep.subr.bf16.mxu0 0
    %812 = vmatpush1.bf16.xpose.msra.mxu0 0
    %813 = vmatprep.subr.bf16.mxu0 0
    %814 = vmatpush1.bf16.xpose.msra.mxu0 0
    %815 = vmatprep.subr.bf16.mxu0 0
    %816 = vmatpush1.bf16.xpose.msra.mxu0 0
    %817 = vmatprep.subr.bf16.mxu0 0
    %818 = vmatpush1.bf16.xpose.msra.mxu0 0
    %819 = vmatprep.subr.bf16.mxu0 0
    %820 = vmatpush1.bf16.xpose.msra.mxu0 0
    %821 = vmatprep.subr.bf16.mxu0 0
    %822 = vmatpush1.bf16.xpose.msra.mxu0 0
    %823 = vmatprep.mubr.bf16.mxu0 0
    %824 = vmatmul.mubr.bf16.gmra.mrb[0].mxu0 %v786
    %v825 = vpop.f32.mrb[0].mxu0
    %v826 = vadd.f32 0.0, %v825
    %v827 = vpop.f32.mrb[0].mxu0
    %v828 = vpop.f32.mrb[0].mxu0
    %v829 = vpop.f32.mrb[0].mxu0
    %830 = vdwg.mxu0
    %v831 = vsel %vm318, %v826, -inf
    %832 = vmax.xlane.f32.xlu0 %v831
    %v833 = vpop.xlane.xlu0 %832
    %v834 = vsub.f32 %v826, %v833
    %v835 = vmul.f32 %v834, 1.442695
    %v836 = vpow.pop %v835
    %v837 = vsel %vm318, %v836, 0.0
    %838 = vadd.xlane.f32.xlu0 %v837
    %v839 = vpop.xlane.xlu0 %838
    %v840 = vrcp.pop %v839
    %v841 = vmul.f32 %v836, %v840
    %s842 = scalar_lea.vmem [#allocation15], 32
    %843 = vst.msk [vmem:[%s842] sm:$0xff] %vm318, %v841
    %v844 = vpack.c.bf16 %v841, %v841
    %v845 = vrot.slane %v317, 4
    %v847 = vsel %vm318, %v844, 0
    %v850 = vsel %vm381, %v845, 0
    %852 = vmatprep.subr.bf16.mxu0 0
    %853 = vmatpush1.bf16.msra.mxu0 %v850
    %854 = vmatprep.subr.bf16.mxu0 0
    %855 = vmatpush1.bf16.msra.mxu0 0
    %856 = vmatprep.subr.bf16.mxu0 0
    %857 = vmatpush1.bf16.msra.mxu0 0
    %858 = vmatprep.subr.bf16.mxu0 0
    %859 = vmatpush1.bf16.msra.mxu0 0
    %860 = vmatprep.subr.bf16.mxu0 0
    %861 = vmatpush1.bf16.msra.mxu0 0
    %862 = vmatprep.subr.bf16.mxu0 0
    %863 = vmatpush1.bf16.msra.mxu0 0
    %864 = vmatprep.subr.bf16.mxu0 0
    %865 = vmatpush1.bf16.msra.mxu0 0
    %866 = vmatprep.subr.bf16.mxu0 0
    %867 = vmatpush1.bf16.msra.mxu0 0
    %868 = vmatprep.subr.bf16.mxu0 0
    %869 = vmatpush1.bf16.msra.mxu0 0
    %870 = vmatprep.subr.bf16.mxu0 0
    %871 = vmatpush1.bf16.msra.mxu0 0
    %872 = vmatprep.subr.bf16.mxu0 0
    %873 = vmatpush1.bf16.msra.mxu0 0
    %874 = vmatprep.subr.bf16.mxu0 0
    %875 = vmatpush1.bf16.msra.mxu0 0
    %876 = vmatprep.subr.bf16.mxu0 0
    %877 = vmatpush1.bf16.msra.mxu0 0
    %878 = vmatprep.subr.bf16.mxu0 0
    %879 = vmatpush1.bf16.msra.mxu0 0
    %880 = vmatprep.subr.bf16.mxu0 0
    %881 = vmatpush1.bf16.msra.mxu0 0
    %882 = vmatprep.subr.bf16.mxu0 0
    %883 = vmatpush1.bf16.msra.mxu0 0
    %884 = vmatprep.mubr.bf16.mxu0 0
    %885 = vmatmul.mubr.bf16.gmra.mrb[0].mxu0 %v847
    %v886 = vpop.f32.mrb[0].mxu0
    %v887 = vadd.f32 0.0, %v886
    %v888 = vpop.f32.mrb[0].mxu0
    %v889 = vpop.f32.mrb[0].mxu0
    %v890 = vpop.f32.mrb[0].mxu0
    %891 = vdwg.mxu0
    %892 = vst.msk [vmem:[#allocation2 + $0x8] sm:$0xff] %vm318, %v887
    %893 = vrot.lane.b32.xlu0 %v783, 120
    %v894 = vpop.permute.xlu0 %893
    %895 = vrot.lane.b32.xlu0 %v784, 120
    %v896 = vpop.permute.xlu0 %895
    %v898 = vsel %vm318, %v894, 0
    %v901 = vsel %vm318, %v896, 0
    %903 = vmatprep.subr.bf16.mxu0 0
    %904 = vmatpush1.bf16.xpose.msra.mxu0 %v901
    %905 = vmatprep.subr.bf16.mxu0 0
    %906 = vmatpush1.bf16.xpose.msra.mxu0 0
    %907 = vmatprep.subr.bf16.mxu0 0
    %908 = vmatpush1.bf16.xpose.msra.mxu0 0
    %909 = vmatprep.subr.bf16.mxu0 0
    %910 = vmatpush1.bf16.xpose.msra.mxu0 0
    %911 = vmatprep.subr.bf16.mxu0 0
    %912 = vmatpush1.bf16.xpose.msra.mxu0 0
    %913 = vmatprep.subr.bf16.mxu0 0
    %914 = vmatpush1.bf16.xpose.msra.mxu0 0
    %915 = vmatprep.subr.bf16.mxu0 0
    %916 = vmatpush1.bf16.xpose.msra.mxu0 0
    %917 = vmatprep.subr.bf16.mxu0 0
    %918 = vmatpush1.bf16.xpose.msra.mxu0 0
    %919 = vmatprep.subr.bf16.mxu0 0
    %920 = vmatpush1.bf16.xpose.msra.mxu0 0
    %921 = vmatprep.subr.bf16.mxu0 0
    %922 = vmatpush1.bf16.xpose.msra.mxu0 0
    %923 = vmatprep.subr.bf16.mxu0 0
    %924 = vmatpush1.bf16.xpose.msra.mxu0 0
    %925 = vmatprep.subr.bf16.mxu0 0
    %926 = vmatpush1.bf16.xpose.msra.mxu0 0
    %927 = vmatprep.subr.bf16.mxu0 0
    %928 = vmatpush1.bf16.xpose.msra.mxu0 0
    %929 = vmatprep.subr.bf16.mxu0 0
    %930 = vmatpush1.bf16.xpose.msra.mxu0 0
    %931 = vmatprep.subr.bf16.mxu0 0
    %932 = vmatpush1.bf16.xpose.msra.mxu0 0
    %933 = vmatprep.subr.bf16.mxu0 0
    %934 = vmatpush1.bf16.xpose.msra.mxu0 0
    %935 = vmatprep.mubr.bf16.mxu0 0
    %936 = vmatmul.mubr.bf16.gmra.mrb[0].mxu0 %v898
    %v937 = vpop.f32.mrb[0].mxu0
    %v938 = vadd.f32 0.0, %v937
    %v939 = vpop.f32.mrb[0].mxu0
    %v940 = vpop.f32.mrb[0].mxu0
    %v941 = vpop.f32.mrb[0].mxu0
    %942 = vdwg.mxu0
    %v943 = vsel %vm318, %v938, -inf
    %944 = vmax.xlane.f32.xlu0 %v943
    %v945 = vpop.xlane.xlu0 %944
    %v946 = vsub.f32 %v938, %v945
    %v947 = vmul.f32 %v946, 1.442695
    %v948 = vpow.pop %v947
    %v949 = vsel %vm318, %v948, 0.0
    %950 = vadd.xlane.f32.xlu0 %v949
    %v951 = vpop.xlane.xlu0 %950
    %v952 = vrcp.pop %v951
    %v953 = vmul.f32 %v948, %v952
    %s954 = scalar_lea.vmem [#allocation15], 40
    %955 = vst.msk [vmem:[%s954] sm:$0xff] %vm318, %v953
    %v956 = vpack.c.bf16 %v953, %v953
    %957 = vrot.lane.b32.xlu0 %v845, 120
    %v958 = vpop.permute.xlu0 %957
    %v960 = vsel %vm318, %v956, 0
    %v963 = vsel %vm381, %v958, 0
    %965 = vmatprep.subr.bf16.mxu0 0
    %966 = vmatpush1.bf16.msra.mxu0 %v963
    %967 = vmatprep.subr.bf16.mxu0 0
    %968 = vmatpush1.bf16.msra.mxu0 0
    %969 = vmatprep.subr.bf16.mxu0 0
    %970 = vmatpush1.bf16.msra.mxu0 0
    %971 = vmatprep.subr.bf16.mxu0 0
    %972 = vmatpush1.bf16.msra.mxu0 0
    %973 = vmatprep.subr.bf16.mxu0 0
    %974 = vmatpush1.bf16.msra.mxu0 0
    %975 = vmatprep.subr.bf16.mxu0 0
    %976 = vmatpush1.bf16.msra.mxu0 0
    %977 = vmatprep.subr.bf16.mxu0 0
    %978 = vmatpush1.bf16.msra.mxu0 0
    %979 = vmatprep.subr.bf16.mxu0 0
    %980 = vmatpush1.bf16.msra.mxu0 0
    %981 = vmatprep.subr.bf16.mxu0 0
    %982 = vmatpush1.bf16.msra.mxu0 0
    %983 = vmatprep.subr.bf16.mxu0 0
    %984 = vmatpush1.bf16.msra.mxu0 0
    %985 = vmatprep.subr.bf16.mxu0 0
    %986 = vmatpush1.bf16.msra.mxu0 0
    %987 = vmatprep.subr.bf16.mxu0 0
    %988 = vmatpush1.bf16.msra.mxu0 0
    %989 = vmatprep.subr.bf16.mxu0 0
    %990 = vmatpush1.bf16.msra.mxu0 0
    %991 = vmatprep.subr.bf16.mxu0 0
    %992 = vmatpush1.bf16.msra.mxu0 0
    %993 = vmatprep.subr.bf16.mxu0 0
    %994 = vmatpush1.bf16.msra.mxu0 0
    %995 = vmatprep.subr.bf16.mxu0 0
    %996 = vmatpush1.bf16.msra.mxu0 0
    %997 = vmatprep.mubr.bf16.mxu0 0
    %998 = vmatmul.mubr.bf16.gmra.mrb[0].mxu0 %v960
    %v999 = vpop.f32.mrb[0].mxu0
    %v1000 = vadd.f32 0.0, %v999
    %v1001 = vpop.f32.mrb[0].mxu0
    %v1002 = vpop.f32.mrb[0].mxu0
    %v1003 = vpop.f32.mrb[0].mxu0
    %1004 = vdwg.mxu0
    %1006 = vrot.lane.b32.xlu0 %v1000, 8
    %v1007 = vpop.permute.xlu0 %1006
    %1009 = vst.msk [vmem:[#allocation2 + $0x8] sm:$0xff] %vm545, %v1007
    %1010 = vrot.lane.b32.xlu0 %v783, 112
    %v1011 = vpop.permute.xlu0 %1010
    %1012 = vrot.lane.b32.xlu0 %v784, 112
    %v1013 = vpop.permute.xlu0 %1012
    %v1015 = vsel %vm318, %v1011, 0
    %v1018 = vsel %vm318, %v1013, 0
    %1020 = vmatprep.subr.bf16.mxu0 0
    %1021 = vmatpush1.bf16.xpose.msra.mxu0 %v1018
    %1022 = vmatprep.subr.bf16.mxu0 0
    %1023 = vmatpush1.bf16.xpose.msra.mxu0 0
    %1024 = vmatprep.subr.bf16.mxu0 0
    %1025 = vmatpush1.bf16.xpose.msra.mxu0 0
    %1026 = vmatprep.subr.bf16.mxu0 0
    %1027 = vmatpush1.bf16.xpose.msra.mxu0 0
    %1028 = vmatprep.subr.bf16.mxu0 0
    %1029 = vmatpush1.bf16.xpose.msra.mxu0 0
    %1030 = vmatprep.subr.bf16.mxu0 0
    %1031 = vmatpush1.bf16.xpose.msra.mxu0 0
    %1032 = vmatprep.subr.bf16.mxu0 0
    %1033 = vmatpush1.bf16.xpose.msra.mxu0 0
    %1034 = vmatprep.subr.bf16.mxu0 0
    %1035 = vmatpush1.bf16.xpose.msra.mxu0 0
    %1036 = vmatprep.subr.bf16.mxu0 0
    %1037 = vmatpush1.bf16.xpose.msra.mxu0 0
    %1038 = vmatprep.subr.bf16.mxu0 0
    %1039 = vmatpush1.bf16.xpose.msra.mxu0 0
    %1040 = vmatprep.subr.bf16.mxu0 0
    %1041 = vmatpush1.bf16.xpose.msra.mxu0 0
    %1042 = vmatprep.subr.bf16.mxu0 0
    %1043 = vmatpush1.bf16.xpose.msra.mxu0 0
    %1044 = vmatprep.subr.bf16.mxu0 0
    %1045 = vmatpush1.bf16.xpose.msra.mxu0 0
    %1046 = vmatprep.subr.bf16.mxu0 0
    %1047 = vmatpush1.bf16.xpose.msra.mxu0 0
    %1048 = vmatprep.subr.bf16.mxu0 0
    %1049 = vmatpush1.bf16.xpose.msra.mxu0 0
    %1050 = vmatprep.subr.bf16.mxu0 0
    %1051 = vmatpush1.bf16.xpose.msra.mxu0 0
    %1052 = vmatprep.mubr.bf16.mxu0 0
    %1053 = vmatmul.mubr.bf16.gmra.mrb[0].mxu0 %v1015
    %v1054 = vpop.f32.mrb[0].mxu0
    %v1055 = vadd.f32 0.0, %v1054
    %v1056 = vpop.f32.mrb[0].mxu0
    %v1057 = vpop.f32.mrb[0].mxu0
    %v1058 = vpop.f32.mrb[0].mxu0
    %1059 = vdwg.mxu0
    %v1060 = vsel %vm318, %v1055, -inf
    %1061 = vmax.xlane.f32.xlu0 %v1060
    %v1062 = vpop.xlane.xlu0 %1061
    %v1063 = vsub.f32 %v1055, %v1062
    %v1064 = vmul.f32 %v1063, 1.442695
    %v1065 = vpow.pop %v1064
    %v1066 = vsel %vm318, %v1065, 0.0
    %1067 = vadd.xlane.f32.xlu0 %v1066
    %v1068 = vpop.xlane.xlu0 %1067
    %v1069 = vrcp.pop %v1068
    %v1070 = vmul.f32 %v1065, %v1069
    %s1071 = scalar_lea.vmem [#allocation15], 48
    %1072 = vst.msk [vmem:[%s1071] sm:$0xff] %vm318, %v1070
    %v1073 = vpack.c.bf16 %v1070, %v1070
    %1074 = vrot.lane.b32.xlu0 %v845, 112
    %v1075 = vpop.permute.xlu0 %1074
    %v1077 = vsel %vm318, %v1073, 0
    %v1080 = vsel %vm381, %v1075, 0
    %1082 = vmatprep.subr.bf16.mxu0 0
    %1083 = vmatpush1.bf16.msra.mxu0 %v1080
    %1084 = vmatprep.subr.bf16.mxu0 0
    %1085 = vmatpush1.bf16.msra.mxu0 0
    %1086 = vmatprep.subr.bf16.mxu0 0
    %1087 = vmatpush1.bf16.msra.mxu0 0
    %1088 = vmatprep.subr.bf16.mxu0 0
    %1089 = vmatpush1.bf16.msra.mxu0 0
    %1090 = vmatprep.subr.bf16.mxu0 0
    %1091 = vmatpush1.bf16.msra.mxu0 0
    %1092 = vmatprep.subr.bf16.mxu0 0
    %1093 = vmatpush1.bf16.msra.mxu0 0
    %1094 = vmatprep.subr.bf16.mxu0 0
    %1095 = vmatpush1.bf16.msra.mxu0 0
    %1096 = vmatprep.subr.bf16.mxu0 0
    %1097 = vmatpush1.bf16.msra.mxu0 0
    %1098 = vmatprep.subr.bf16.mxu0 0
    %1099 = vmatpush1.bf16.msra.mxu0 0
    %1100 = vmatprep.subr.bf16.mxu0 0
    %1101 = vmatpush1.bf16.msra.mxu0 0
    %1102 = vmatprep.subr.bf16.mxu0 0
    %1103 = vmatpush1.bf16.msra.mxu0 0
    %1104 = vmatprep.subr.bf16.mxu0 0
    %1105 = vmatpush1.bf16.msra.mxu0 0
    %1106 = vmatprep.subr.bf16.mxu0 0
    %1107 = vmatpush1.bf16.msra.mxu0 0
    %1108 = vmatprep.subr.bf16.mxu0 0
    %1109 = vmatpush1.bf16.msra.mxu0 0
    %1110 = vmatprep.subr.bf16.mxu0 0
    %1111 = vmatpush1.bf16.msra.mxu0 0
    %1112 = vmatprep.subr.bf16.mxu0 0
    %1113 = vmatpush1.bf16.msra.mxu0 0
    %1114 = vmatprep.mubr.bf16.mxu0 0
    %1115 = vmatmul.mubr.bf16.gmra.mrb[0].mxu0 %v1077
    %v1116 = vpop.f32.mrb[0].mxu0
    %v1117 = vadd.f32 0.0, %v1116
    %v1118 = vpop.f32.mrb[0].mxu0
    %v1119 = vpop.f32.mrb[0].mxu0
    %v1120 = vpop.f32.mrb[0].mxu0
    %1121 = vdwg.mxu0
    %1123 = vrot.lane.b32.xlu0 %v1117, 16
    %v1124 = vpop.permute.xlu0 %1123
    %1126 = vst.msk [vmem:[#allocation2 + $0x8] sm:$0xff] %vm663, %v1124
    %1127 = vrot.lane.b32.xlu0 %v783, 104
    %v1128 = vpop.permute.xlu0 %1127
    %1129 = vrot.lane.b32.xlu0 %v784, 104
    %v1130 = vpop.permute.xlu0 %1129
    %v1132 = vsel %vm318, %v1128, 0
    %v1135 = vsel %vm318, %v1130, 0
    %1137 = vmatprep.subr.bf16.mxu0 0
    %1138 = vmatpush1.bf16.xpose.msra.mxu0 %v1135
    %1139 = vmatprep.subr.bf16.mxu0 0
    %1140 = vmatpush1.bf16.xpose.msra.mxu0 0
    %1141 = vmatprep.subr.bf16.mxu0 0
    %1142 = vmatpush1.bf16.xpose.msra.mxu0 0
    %1143 = vmatprep.subr.bf16.mxu0 0
    %1144 = vmatpush1.bf16.xpose.msra.mxu0 0
    %1145 = vmatprep.subr.bf16.mxu0 0
    %1146 = vmatpush1.bf16.xpose.msra.mxu0 0
    %1147 = vmatprep.subr.bf16.mxu0 0
    %1148 = vmatpush1.bf16.xpose.msra.mxu0 0
    %1149 = vmatprep.subr.bf16.mxu0 0
    %1150 = vmatpush1.bf16.xpose.msra.mxu0 0
    %1151 = vmatprep.subr.bf16.mxu0 0
    %1152 = vmatpush1.bf16.xpose.msra.mxu0 0
    %1153 = vmatprep.subr.bf16.mxu0 0
    %1154 = vmatpush1.bf16.xpose.msra.mxu0 0
    %1155 = vmatprep.subr.bf16.mxu0 0
    %1156 = vmatpush1.bf16.xpose.msra.mxu0 0
    %1157 = vmatprep.subr.bf16.mxu0 0
    %1158 = vmatpush1.bf16.xpose.msra.mxu0 0
    %1159 = vmatprep.subr.bf16.mxu0 0
    %1160 = vmatpush1.bf16.xpose.msra.mxu0 0
    %1161 = vmatprep.subr.bf16.mxu0 0
    %1162 = vmatpush1.bf16.xpose.msra.mxu0 0
    %1163 = vmatprep.subr.bf16.mxu0 0
    %1164 = vmatpush1.bf16.xpose.msra.mxu0 0
    %1165 = vmatprep.subr.bf16.mxu0 0
    %1166 = vmatpush1.bf16.xpose.msra.mxu0 0
    %1167 = vmatprep.subr.bf16.mxu0 0
    %1168 = vmatpush1.bf16.xpose.msra.mxu0 0
    %1169 = vmatprep.mubr.bf16.mxu0 0
    %1170 = vmatmul.mubr.bf16.gmra.mrb[0].mxu0 %v1132
    %v1171 = vpop.f32.mrb[0].mxu0
    %v1172 = vadd.f32 0.0, %v1171
    %v1173 = vpop.f32.mrb[0].mxu0
    %v1174 = vpop.f32.mrb[0].mxu0
    %v1175 = vpop.f32.mrb[0].mxu0
    %1176 = vdwg.mxu0
    %v1177 = vsel %vm318, %v1172, -inf
    %1178 = vmax.xlane.f32.xlu0 %v1177
    %v1179 = vpop.xlane.xlu0 %1178
    %v1180 = vsub.f32 %v1172, %v1179
    %v1181 = vmul.f32 %v1180, 1.442695
    %v1182 = vpow.pop %v1181
    %v1183 = vsel %vm318, %v1182, 0.0
    %1184 = vadd.xlane.f32.xlu0 %v1183
    %v1185 = vpop.xlane.xlu0 %1184
    %v1186 = vrcp.pop %v1185
    %v1187 = vmul.f32 %v1182, %v1186
    %s1188 = scalar_lea.vmem [#allocation15], 56
    %1189 = vst.msk [vmem:[%s1188] sm:$0xff] %vm318, %v1187
    %v1190 = vpack.c.bf16 %v1187, %v1187
    %1191 = vrot.lane.b32.xlu0 %v845, 104
    %v1192 = vpop.permute.xlu0 %1191
    %v1194 = vsel %vm318, %v1190, 0
    %v1197 = vsel %vm381, %v1192, 0
    %1199 = vmatprep.subr.bf16.mxu0 0
    %1200 = vmatpush1.bf16.msra.mxu0 %v1197
    %1201 = vmatprep.subr.bf16.mxu0 0
    %1202 = vmatpush1.bf16.msra.mxu0 0
    %1203 = vmatprep.subr.bf16.mxu0 0
    %1204 = vmatpush1.bf16.msra.mxu0 0
    %1205 = vmatprep.subr.bf16.mxu0 0
    %1206 = vmatpush1.bf16.msra.mxu0 0
    %1207 = vmatprep.subr.bf16.mxu0 0
    %1208 = vmatpush1.bf16.msra.mxu0 0
    %1209 = vmatprep.subr.bf16.mxu0 0
    %1210 = vmatpush1.bf16.msra.mxu0 0
    %1211 = vmatprep.subr.bf16.mxu0 0
    %1212 = vmatpush1.bf16.msra.mxu0 0
    %1213 = vmatprep.subr.bf16.mxu0 0
    %1214 = vmatpush1.bf16.msra.mxu0 0
    %1215 = vmatprep.subr.bf16.mxu0 0
    %1216 = vmatpush1.bf16.msra.mxu0 0
    %1217 = vmatprep.subr.bf16.mxu0 0
    %1218 = vmatpush1.bf16.msra.mxu0 0
    %1219 = vmatprep.subr.bf16.mxu0 0
    %1220 = vmatpush1.bf16.msra.mxu0 0
    %1221 = vmatprep.subr.bf16.mxu0 0
    %1222 = vmatpush1.bf16.msra.mxu0 0
    %1223 = vmatprep.subr.bf16.mxu0 0
    %1224 = vmatpush1.bf16.msra.mxu0 0
    %1225 = vmatprep.subr.bf16.mxu0 0
    %1226 = vmatpush1.bf16.msra.mxu0 0
    %1227 = vmatprep.subr.bf16.mxu0 0
    %1228 = vmatpush1.bf16.msra.mxu0 0
    %1229 = vmatprep.subr.bf16.mxu0 0
    %1230 = vmatpush1.bf16.msra.mxu0 0
    %1231 = vmatprep.mubr.bf16.mxu0 0
    %1232 = vmatmul.mubr.bf16.gmra.mrb[0].mxu0 %v1194
    %v1233 = vpop.f32.mrb[0].mxu0
    %v1234 = vadd.f32 0.0, %v1233
    %v1235 = vpop.f32.mrb[0].mxu0
    %v1236 = vpop.f32.mrb[0].mxu0
    %v1237 = vpop.f32.mrb[0].mxu0
    %1238 = vdwg.mxu0
    %1240 = vrot.lane.b32.xlu0 %v1234, 24
    %v1241 = vpop.permute.xlu0 %1240
    %1243 = vst.msk [vmem:[#allocation2 + $0x8] sm:$0xff] %vm781, %v1241
    %v1244 = vld [vmem:[#allocation2] sm:$0xff]
    %v1245 = vld [vmem:[#allocation2 + $0x8] sm:$0xff]
    %v1246 = vpack.c.bf16 %v1245, %v1244
    %v1247 = vld [vmem:[#allocation12] sm:$0xf]
    %v1248 = vld [vmem:[#allocation12 + $0x4] sm:$0xf]
    %v1249 = vld [vmem:[#allocation12 + $0x8] sm:$0xf]
    %v1250 = vld [vmem:[#allocation12 + $0xc] sm:$0xf]
    %v1255 = vunpack.c.l.b16 %v1247
    %v1256 = vunpack.c.l.b16 %v1248
    %v1257 = vunpack.c.l.b16 %v1249
    %v1258 = vunpack.c.l.b16 %v1250
    %v1259 = vpack.c.b16 %v1256, %v1255
    %v1260 = vpack.c.b16 %v1258, %v1257
    %v1264 = vsel %vm136, %v1246, 0
    %1266 = vmatprep.subr.bf16.mxu0 0
    %1267 = vmatpush1.bf16.msra.mxu0 %v1259
    %1268 = vmatprep.subr.bf16.mxu0 0
    %1269 = vmatpush1.bf16.msra.mxu0 %v1260
    %1270 = vmatprep.subr.bf16.mxu0 0
    %1271 = vmatpush1.bf16.msra.mxu0 0
    %1272 = vmatprep.subr.bf16.mxu0 0
    %1273 = vmatpush1.bf16.msra.mxu0 0
    %1274 = vmatprep.subr.bf16.mxu0 0
    %1275 = vmatpush1.bf16.msra.mxu0 0
    %1276 = vmatprep.subr.bf16.mxu0 0
    %1277 = vmatpush1.bf16.msra.mxu0 0
    %1278 = vmatprep.subr.bf16.mxu0 0
    %1279 = vmatpush1.bf16.msra.mxu0 0
    %1280 = vmatprep.subr.bf16.mxu0 0
    %1281 = vmatpush1.bf16.msra.mxu0 0
    %1282 = vmatprep.subr.bf16.mxu0 0
    %1283 = vmatpush1.bf16.msra.mxu0 0
    %1284 = vmatprep.subr.bf16.mxu0 0
    %1285 = vmatpush1.bf16.msra.mxu0 0
    %1286 = vmatprep.subr.bf16.mxu0 0
    %1287 = vmatpush1.bf16.msra.mxu0 0
    %1288 = vmatprep.subr.bf16.mxu0 0
    %1289 = vmatpush1.bf16.msra.mxu0 0
    %1290 = vmatprep.subr.bf16.mxu0 0
    %1291 = vmatpush1.bf16.msra.mxu0 0
    %1292 = vmatprep.subr.bf16.mxu0 0
    %1293 = vmatpush1.bf16.msra.mxu0 0
    %1294 = vmatprep.subr.bf16.mxu0 0
    %1295 = vmatpush1.bf16.msra.mxu0 0
    %1296 = vmatprep.subr.bf16.mxu0 0
    %1297 = vmatpush1.bf16.msra.mxu0 0
    %1298 = vmatprep.mubr.bf16.mxu0 0
    %1299 = vmatmul.mubr.bf16.gmra.mrb[0].mxu0 %v1264
    %v1300 = vpop.f32.mrb[0].mxu0
    %v1301 = vadd.f32 0.0, %v1300
    %v1302 = vpop.f32.mrb[0].mxu0
    %v1303 = vpop.f32.mrb[0].mxu0
    %v1304 = vadd.f32 0.0, %v1303
    %v1305 = vpop.f32.mrb[0].mxu0
    %1306 = vdwg.mxu0
    %1307 = vst.msk [vmem:[#allocation14] sm:$0xff] %vm136, %v1301
    %1308 = vst.msk [vmem:[#allocation14 + $0x8] sm:$0xff] %vm136, %v1304
    // Predicated region
    $region54: #{tpu_custom_call.1} parent=1 // pred_check
      _
    $region55: #{tpu_custom_call.1} parent=1 // pred_check_branch
      %1310 = sbr.rel (0) target = $region57
    $region56: #{tpu_custom_call.1} parent=1 // pred_region
      %s1312 = ssub.s32 256, 256
      %1313 = vsyncadd [#allocation5], %s1312
      %s1314 = sshll.u32 [#allocation14], 4
      %s1315 = int_to_ptr.vmem [resolvable:$true] %s1314
      %1320 = dma.vmem_to_hbm [thread:$0]  %s1315, 256, %s7, [#allocation5], 128, 128, 8
    $region57: #{tpu_custom_call.1} parent=1 // pred_fallthru
      _
    // Predicated region
    $region58: #{tpu_custom_call.1} parent=1 // pred_check
      _
    $region59: #{tpu_custom_call.1} parent=1 // pred_check_branch
      %1322 = sbr.rel (0) target = $region61
    $region60: #{tpu_custom_call.1} parent=1 // pred_region
      %s1324 = ssub.s32 1024, 1024
      %1325 = vsyncadd [#allocation16], %s1324
      %s1326 = sshll.u32 [#allocation15], 4
      %s1327 = int_to_ptr.vmem [resolvable:$true] %s1326
      %1332 = dma.vmem_to_hbm [thread:$0]  %s1327, 1024, %s8, [#allocation16], 128, 128, 8
    $region61: #{tpu_custom_call.1} parent=1 // pred_fallthru
      _
    // Predicated region
    $region62: #{tpu_custom_call.1} parent=1 // pred_check
      _
    $region63: #{tpu_custom_call.1} parent=1 // pred_check_branch
      %1334 = sbr.rel (0) target = $region65
    $region64: #{tpu_custom_call.1} parent=1 // pred_region
      %1335 = dma.done [#allocation5], 256
    $region65: #{tpu_custom_call.1} parent=1 // pred_fallthru
      _
    // Predicated region
    $region66: #{tpu_custom_call.1} parent=1 // pred_check
      _
    $region67: #{tpu_custom_call.1} parent=1 // pred_check_branch
      %1337 = sbr.rel (0) target = $region69
    $region68: #{tpu_custom_call.1} parent=1 // pred_region
      %1338 = dma.done [#allocation16], 1024
    $region69: #{tpu_custom_call.1} parent=1 // pred_fallthru
      _
    %1339 = vsyncpa [#allocation4], 1
    %1340 = vsyncpa [#allocation7], 1
    %1341 = vsyncpa [#allocation10], 1
    %1342 = vsyncpa [#allocation13], 1
    %1343 = vsyncpa [#allocation5], 1
    %1344 = vsyncpa [#allocation16], 1

</llo_original>
